<compile_context>
chip_gen: v6e
topology: v6e:2x2x1
jax: 0.10.0
libtpu: 0.0.40
codegen_flags: <defaults>
</compile_context>

<pallas_src>
import functools

import numpy as np
import jax
import jax.numpy as jnp
from jax import lax
from jax.experimental import pallas as pl
from jax.experimental.pallas import tpu as pltpu

VMEM_SPEC = pl.BlockSpec(memory_space=pltpu.MemorySpace.VMEM)
LANE = 128


# ----------------------------- fused Pallas kernel ---------------------------

def _critic_kernel(*refs, n_conv, lay):
    # refs = (obs_flat, action, conv_mat[0..n_conv-1],
    #         wh, wqz, wqa, wq2, wq3, bias_vec, out)
    obs_ref, act_ref = refs[0], refs[1]
    conv_refs = refs[2:2 + n_conv]
    wh_ref, wqz_ref, wqa_ref, wq2_ref, wq3_ref, bvec_ref = refs[2 + n_conv:8 + n_conv]
    o_ref = refs[8 + n_conv]

    def bias(name):
        off, ln = lay[name]          # static, 128-aligned offsets
        return bvec_ref[:, off:off + ln]                      # (1, ln) f32

    def bdot(a_f32, w_ref):          # bf16 MXU matmul, f32 accumulation
        return jnp.dot(a_f32.astype(jnp.bfloat16), w_ref[...],
                       preferred_element_type=jnp.float32)

    # Encoder convs: dense conv-matmul (1/255 folded into layer 0) -> bias -> ReLU.
    x = obs_ref[...]                                          # (N, C*H*W) f32
    for i, m_ref in enumerate(conv_refs):
        x = jnp.maximum(bdot(x, m_ref) + bias(f"conv{i}"), 0.0)  # NCHW-flat, lane-padded

    # Head: Linear -> LayerNorm(eps=1e-5, biased var) -> tanh.  (f32 elementwise)
    y = bdot(x, wh_ref) + bias("bh")
    mean = jnp.mean(y, axis=-1, keepdims=True)
    var = jnp.mean((y - mean) ** 2, axis=-1, keepdims=True)
    y = (y - mean) * lax.rsqrt(var + 1e-5)
    z = jnp.tanh(y * bias("gamma") + bias("beta"))            # (N, feature_dim)

    # Merged Q1/Q2 MLP (block-diagonal weights; first layer split into a z-part
    # and an action-part so no concat is needed).
    h = bdot(z, wqz_ref) + bdot(act_ref[...], wqa_ref) + bias("qb1")
    h = jnp.maximum(h, 0.0)
    h = jnp.maximum(bdot(h, wq2_ref) + bias("qb2"), 0.0)
    o_ref[...] = bdot(h, wq3_ref) + bias("qb3")               # (N, 128): lanes 0/1 = q1/q2


def critic_forward(arrays, obs, action, *, lay):
    n = obs.shape[0]
    obs_flat = obs.astype(jnp.float32).reshape(n, -1)         # NCHW flatten (free)
    act = action.astype(jnp.float32)
    conv_mats = arrays["conv_mats"]
    operands = [obs_flat, act, *conv_mats,
                arrays["wh"], arrays["wqz"], arrays["wqa"],
                arrays["wq2"], arrays["wq3"], arrays["bvec"]]
    q12 = pl.pallas_call(
        functools.partial(_critic_kernel, n_conv=len(conv_mats), lay=lay),
        out_shape=jax.ShapeDtypeStruct((n, LANE), jnp.float32),   # lane-dense output
        in_specs=[VMEM_SPEC] * len(operands),
        out_specs=VMEM_SPEC,
        compiler_params=pltpu.CompilerParams(vmem_limit_bytes=32 * 1024 * 1024),
    )(*operands)
    return q12[:, 0:1], q12[:, 1:2]


# ---------------------- init-time fusion of the parameters -------------------

def conv_as_dense_matmul(w_oihw, in_hw, stride):
    """Expand a (valid-padded) conv into a dense (Cin*H*W, Cout*Ho*Wo) matrix.

    Row order matches NCHW flatten of the input, column order matches NCHW
    flatten of the output, so  x_flat @ M  ==  conv(x).flatten(NCHW).
    """
    w = np.asarray(w_oihw, dtype=np.float32)
    Cout, Cin, KH, KW = w.shape
    H, W = in_hw
    Ho = (H - KH) // stride + 1
    Wo = (W - KW) // stride + 1
    M = np.zeros((Cin * H * W, Cout * Ho * Wo), dtype=np.float32)
    co, oh, ow, ci, kh, kw = np.meshgrid(
        np.arange(Cout), np.arange(Ho), np.arange(Wo),
        np.arange(Cin), np.arange(KH), np.arange(KW), indexing="ij")
    rows = ci * (H * W) + (oh * stride + kh) * W + (ow * stride + kw)
    cols = co * (Ho * Wo) + oh * Wo + ow
    M[rows.ravel(), cols.ravel()] = w[co, ci, kh, kw].ravel()
    return M, (Ho, Wo)


def _pad_to(n, m=LANE):
    return -(-n // m) * m


def _pack_bias_segments(named_segs, align=LANE):
    lay, off = {}, 0
    for name, seg in named_segs:
        n = int(np.asarray(seg).shape[0])
        lay[name] = (off, n)
        off += -(-n // align) * align
    buf = np.zeros((1, off), dtype=np.float32)
    for name, seg in named_segs:
        o, n = lay[name]
        buf[0, o:o + n] = np.asarray(seg, dtype=np.float32)
    return jnp.asarray(buf), lay


def build_fused_params(raw, obs_shape, cfg):
    """Lower convs to dense matrices, merge Q1/Q2, pad everything to 128 lanes,
    fold 1/255 into conv1 and store all matmul weights in bf16."""
    C, H, W = obs_shape
    fd, hd = cfg["feature_dim"], cfg["hidden_dim"]

    conv_mats, bias_segs = [], []
    in_hw = (H, W)
    k_in = C * H * W                                          # 1024 (already 128-aligned)
    for i, (w, b, stride) in enumerate(raw["convs"]):
        M, in_hw = conv_as_dense_matmul(w, in_hw, stride)
        if i == 0:
            M *= (1.0 / 255.0)                                # fold /255 into conv1
        K, N = M.shape
        Np = _pad_to(N)
        Mp = np.zeros((k_in, Np), np.float32)                 # zero-pad K rows + N cols
        Mp[:K, :N] = M
        conv_mats.append(jnp.asarray(Mp, dtype=jnp.bfloat16))
        bseg = np.zeros(Np, np.float32)                       # padded bias lanes stay 0
        bseg[:N] = np.repeat(np.asarray(b, np.float32), in_hw[0] * in_hw[1])
        bias_segs.append((f"conv{i}", bseg))
        k_in = Np

    wh, bh, gamma, beta = [np.asarray(t, np.float32) for t in raw["head"]]
    whp = np.zeros((k_in, fd), np.float32)                    # K padded to match conv out
    whp[:wh.shape[0], :] = wh

    w1a, b1a, w2a, b2a, w3a, b3a = [np.asarray(t, np.float32) for t in raw["Q1"]]
    w1b, b1b, w2b, b2b, w3b, b3b = [np.asarray(t, np.float32) for t in raw["Q2"]]
    wqz = np.concatenate([w1a[:fd], w1b[:fd]], axis=1)        # (fd,   2*hd)
    wqa = np.concatenate([w1a[fd:], w1b[fd:]], axis=1)        # (adim, 2*hd)
    wq2 = np.zeros((2 * hd, 2 * hd), np.float32)              # block diagonal
    wq2[:hd, :hd] = w2a
    wq2[hd:, hd:] = w2b
    wq3 = np.zeros((2 * hd, LANE), np.float32)                # lane-dense output (pad 2->128)
    wq3[:hd, 0:1] = w3a
    wq3[hd:, 1:2] = w3b
    qb3 = np.zeros(LANE, np.float32)
    qb3[0], qb3[1] = float(b3a[0]), float(b3b[0])

    bias_segs += [("bh", bh), ("gamma", gamma), ("beta", beta),
                  ("qb1", np.concatenate([b1a, b1b])),
                  ("qb2", np.concatenate([b2a, b2b])),
                  ("qb3", qb3)]
    bvec, lay = _pack_bias_segments(bias_segs)

    bf16 = jnp.bfloat16
    arrays = {"conv_mats": conv_mats,
              "wh": jnp.asarray(whp, bf16), "wqz": jnp.asarray(wqz, bf16),
              "wqa": jnp.asarray(wqa, bf16), "wq2": jnp.asarray(wq2, bf16),
              "wq3": jnp.asarray(wq3, bf16), "bvec": bvec}
    return arrays, lay


# --------------------------- parameter initialization ------------------------

def init_raw_params(key, obs_shape, action_dim, cfg):
    C, H, W = obs_shape
    nf, nl = cfg["num_filters"], cfg["num_conv_layers"]
    fd, hd = cfg["feature_dim"], cfg["hidden_dim"]
    ks = iter(jax.random.split(key, 64))

    def rnd(shape, scale=0.05):
        return scale * jax.random.normal(next(ks), shape, dtype=jnp.float32)

    convs = [(rnd((nf, C, 3, 3)), rnd((nf,)), 2)]             # (weight OIHW, bias, stride)
    h, w = (H - 3) // 2 + 1, (W - 3) // 2 + 1
    for _ in range(1, nl):
        convs.append((rnd((nf, nf, 3, 3)), rnd((nf,)), 1))
        h, w = h - 2, w - 2
    flat = nf * h * w

    head = (rnd((flat, fd)), rnd((fd,)),                      # Linear W (in,out), b
            1.0 + rnd((fd,)), rnd((fd,)))                     # LayerNorm gamma, beta

    def q():
        ind = fd + action_dim
        return (rnd((ind, hd)), rnd((hd,)),
                rnd((hd, hd)), rnd((hd,)),
                rnd((hd, 1)), rnd((1,)))

    return {"convs": convs, "head": head, "Q1": q(), "Q2": q()}


# ------------------------------ pure-JAX reference ---------------------------

def critic_reference(raw, obs, action):
    x = obs.astype(jnp.float32) / 255.0
    for (w, b, stride) in raw["convs"]:
        x = lax.conv_general_dilated(x, w, (stride, stride), "VALID",
                                     dimension_numbers=("NCHW", "OIHW", "NCHW"))
        x = jnp.maximum(x + b.reshape(1, -1, 1, 1), 0.0)
    h = x.reshape(x.shape[0], -1)
    wh, bh, gamma, beta = raw["head"]
    y = h @ wh + bh
    mean = y.mean(-1, keepdims=True)
    var = ((y - mean) ** 2).mean(-1, keepdims=True)
    z = jnp.tanh((y - mean) * lax.rsqrt(var + 1e-5) * gamma + beta)
    oa = jnp.concatenate([z, action.astype(jnp.float32)], axis=-1)

    def qmlp(p):
        w1, b1, w2, b2, w3, b3 = p
        t = jnp.maximum(oa @ w1 + b1, 0.0)
        t = jnp.maximum(t @ w2 + b2, 0.0)
        return t @ w3 + b3

    return qmlp(raw["Q1"]), qmlp(raw["Q2"])


# ------------------------------------ main ------------------------------------

if __name__ == "__main__":
    cfg = dict(num_conv_layers=2, num_filters=8, feature_dim=32,
               hidden_dim=32, hidden_depth=2)
    obs_shape = (4, 16, 16)
    action_dim = 4
    batch = 2

    key = jax.random.PRNGKey(0)
    k_param, k_obs, k_act = jax.random.split(key, 3)

    raw = init_raw_params(k_param, obs_shape, action_dim, cfg)
    arrays, lay = build_fused_params(raw, obs_shape, cfg)

    obs = jax.random.uniform(k_obs, (batch,) + obs_shape,
                             minval=0.0, maxval=255.0, dtype=jnp.float32)
    action = jax.random.normal(k_act, (batch, action_dim), dtype=jnp.float32)

    fwd = jax.jit(functools.partial(critic_forward, lay=lay))
    q1, q2 = fwd(arrays, obs, action)
    jax.block_until_ready((q1, q2))
    assert q1.shape == (batch, 1) and q2.shape == (batch, 1)

    r1, r2 = critic_reference(raw, obs, action)
    np.testing.assert_allclose(np.asarray(q1), np.asarray(r1), rtol=2e-2, atol=2e-2)
    np.testing.assert_allclose(np.asarray(q2), np.asarray(r2), rtol=2e-2, atol=2e-2)

    print("KERNEL_OK")
</pallas_src>

<mosaic_0001>
module attributes {stable_mosaic.version = 11 : i64} {
  func.func @_critic_kernel(%arg0: memref<2x1024xf32, #tpu.memory_space<vmem>>, %arg1: memref<2x4xf32, #tpu.memory_space<vmem>>, %arg2: memref<1024x512xbf16, #tpu.memory_space<vmem>>, %arg3: memref<512x256xbf16, #tpu.memory_space<vmem>>, %arg4: memref<256x32xbf16, #tpu.memory_space<vmem>>, %arg5: memref<32x64xbf16, #tpu.memory_space<vmem>>, %arg6: memref<4x64xbf16, #tpu.memory_space<vmem>>, %arg7: memref<64x64xbf16, #tpu.memory_space<vmem>>, %arg8: memref<64x128xbf16, #tpu.memory_space<vmem>>, %arg9: memref<1x1536xf32, #tpu.memory_space<vmem>>, %arg10: memref<2x128xf32, #tpu.memory_space<vmem>>) attributes {dimension_semantics = [], scalar_prefetch = 0 : i64, scratch_operands = 0 : i64, tpu.core_type = #tpu.core_type<tc>} {
    %c0 = arith.constant 0 : index
    %c0_0 = arith.constant 0 : index
    %0 = vector.load %arg0[%c0, %c0_0] : memref<2x1024xf32, #tpu.memory_space<vmem>>, vector<2x1024xf32>
    %1 = arith.truncf %0 : vector<2x1024xf32> to vector<2x1024xbf16>
    %c0_1 = arith.constant 0 : index
    %c0_2 = arith.constant 0 : index
    %2 = vector.load %arg2[%c0_1, %c0_2] : memref<1024x512xbf16, #tpu.memory_space<vmem>>, vector<1024x512xbf16>
    %cst = arith.constant dense<0.000000e+00> : vector<2x512xf32>
    %3 = tpu.matmul %1, %2, %cst {dimension_numbers = #tpu.dot_dimension_numbers<[1], [0], [0], [1], [0, 0, 1, 1], [], []>} : vector<2x1024xbf16>, vector<1024x512xbf16>, vector<2x512xf32> -> vector<2x512xf32>
    %c0_3 = arith.constant 0 : index
    %c0_4 = arith.constant 0 : index
    %4 = vector.load %arg9[%c0_3, %c0_4] : memref<1x1536xf32, #tpu.memory_space<vmem>>, vector<1x512xf32>
    %5 = vector.broadcast %4 : vector<1x512xf32> to vector<2x512xf32>
    %6 = arith.addf %3, %5 : vector<2x512xf32>
    %cst_5 = arith.constant 0.000000e+00 : f32
    %7 = vector.broadcast %cst_5 : f32 to vector<2x512xf32>
    %8 = arith.maximumf %6, %7 : vector<2x512xf32>
    %9 = arith.truncf %8 : vector<2x512xf32> to vector<2x512xbf16>
    %c0_6 = arith.constant 0 : index
    %c0_7 = arith.constant 0 : index
    %10 = vector.load %arg3[%c0_6, %c0_7] : memref<512x256xbf16, #tpu.memory_space<vmem>>, vector<512x256xbf16>
    %cst_8 = arith.constant dense<0.000000e+00> : vector<2x256xf32>
    %11 = tpu.matmul %9, %10, %cst_8 {dimension_numbers = #tpu.dot_dimension_numbers<[1], [0], [0], [1], [0, 0, 1, 1], [], []>} : vector<2x512xbf16>, vector<512x256xbf16>, vector<2x256xf32> -> vector<2x256xf32>
    %c0_9 = arith.constant 0 : index
    %c512 = arith.constant 512 : index
    %12 = vector.load %arg9[%c0_9, %c512] : memref<1x1536xf32, #tpu.memory_space<vmem>>, vector<1x256xf32>
    %13 = vector.broadcast %12 : vector<1x256xf32> to vector<2x256xf32>
    %14 = arith.addf %11, %13 : vector<2x256xf32>
    %cst_10 = arith.constant 0.000000e+00 : f32
    %15 = vector.broadcast %cst_10 : f32 to vector<2x256xf32>
    %16 = arith.maximumf %14, %15 : vector<2x256xf32>
    %17 = arith.truncf %16 : vector<2x256xf32> to vector<2x256xbf16>
    %c0_11 = arith.constant 0 : index
    %c0_12 = arith.constant 0 : index
    %18 = vector.load %arg4[%c0_11, %c0_12] : memref<256x32xbf16, #tpu.memory_space<vmem>>, vector<256x32xbf16>
    %cst_13 = arith.constant dense<0.000000e+00> : vector<2x32xf32>
    %19 = tpu.matmul %17, %18, %cst_13 {dimension_numbers = #tpu.dot_dimension_numbers<[1], [0], [0], [1], [0, 0, 1, 1], [], []>} : vector<2x256xbf16>, vector<256x32xbf16>, vector<2x32xf32> -> vector<2x32xf32>
    %c0_14 = arith.constant 0 : index
    %c768 = arith.constant 768 : index
    %20 = vector.load %arg9[%c0_14, %c768] : memref<1x1536xf32, #tpu.memory_space<vmem>>, vector<1x32xf32>
    %21 = vector.broadcast %20 : vector<1x32xf32> to vector<2x32xf32>
    %22 = arith.addf %19, %21 : vector<2x32xf32>
    %cst_15 = arith.constant dense<0.000000e+00> : vector<2xf32>
    %23 = vector.multi_reduction <add>, %22, %cst_15 [1] : vector<2x32xf32> to vector<2xf32>
    %24 = vector.shape_cast %23 : vector<2xf32> to vector<2x1xf32>
    %cst_16 = arith.constant 3.200000e+01 : f32
    %25 = vector.broadcast %cst_16 : f32 to vector<2x1xf32>
    %26 = arith.divf %24, %25 : vector<2x1xf32>
    %27 = vector.broadcast %26 : vector<2x1xf32> to vector<2x32xf32>
    %28 = arith.subf %22, %27 : vector<2x32xf32>
    %29 = arith.mulf %28, %28 : vector<2x32xf32>
    %cst_17 = arith.constant dense<0.000000e+00> : vector<2xf32>
    %30 = vector.multi_reduction <add>, %29, %cst_17 [1] : vector<2x32xf32> to vector<2xf32>
    %31 = vector.shape_cast %30 : vector<2xf32> to vector<2x1xf32>
    %cst_18 = arith.constant 3.200000e+01 : f32
    %32 = vector.broadcast %cst_18 : f32 to vector<2x1xf32>
    %33 = arith.divf %31, %32 : vector<2x1xf32>
    %34 = vector.broadcast %26 : vector<2x1xf32> to vector<2x32xf32>
    %35 = arith.subf %22, %34 : vector<2x32xf32>
    %cst_19 = arith.constant 9.99999974E-6 : f32
    %36 = vector.broadcast %cst_19 : f32 to vector<2x1xf32>
    %37 = arith.addf %33, %36 : vector<2x1xf32>
    %38 = math.rsqrt %37 : vector<2x1xf32>
    %39 = vector.broadcast %38 : vector<2x1xf32> to vector<2x32xf32>
    %40 = arith.mulf %35, %39 : vector<2x32xf32>
    %c0_20 = arith.constant 0 : index
    %c896 = arith.constant 896 : index
    %41 = vector.load %arg9[%c0_20, %c896] : memref<1x1536xf32, #tpu.memory_space<vmem>>, vector<1x32xf32>
    %42 = vector.broadcast %41 : vector<1x32xf32> to vector<2x32xf32>
    %43 = arith.mulf %40, %42 : vector<2x32xf32>
    %c0_21 = arith.constant 0 : index
    %c1024 = arith.constant 1024 : index
    %44 = vector.load %arg9[%c0_21, %c1024] : memref<1x1536xf32, #tpu.memory_space<vmem>>, vector<1x32xf32>
    %45 = vector.broadcast %44 : vector<1x32xf32> to vector<2x32xf32>
    %46 = arith.addf %43, %45 : vector<2x32xf32>
    %47 = math.tanh %46 : vector<2x32xf32>
    %48 = arith.truncf %47 : vector<2x32xf32> to vector<2x32xbf16>
    %c0_22 = arith.constant 0 : index
    %c0_23 = arith.constant 0 : index
    %49 = vector.load %arg5[%c0_22, %c0_23] : memref<32x64xbf16, #tpu.memory_space<vmem>>, vector<32x64xbf16>
    %cst_24 = arith.constant dense<0.000000e+00> : vector<2x64xf32>
    %50 = tpu.matmul %48, %49, %cst_24 {dimension_numbers = #tpu.dot_dimension_numbers<[1], [0], [0], [1], [0, 0, 1, 1], [], []>} : vector<2x32xbf16>, vector<32x64xbf16>, vector<2x64xf32> -> vector<2x64xf32>
    %c0_25 = arith.constant 0 : index
    %c0_26 = arith.constant 0 : index
    %51 = vector.load %arg1[%c0_25, %c0_26] : memref<2x4xf32, #tpu.memory_space<vmem>>, vector<2x4xf32>
    %52 = arith.truncf %51 : vector<2x4xf32> to vector<2x4xbf16>
    %c0_27 = arith.constant 0 : index
    %c0_28 = arith.constant 0 : index
    %53 = vector.load %arg6[%c0_27, %c0_28] : memref<4x64xbf16, #tpu.memory_space<vmem>>, vector<4x64xbf16>
    %cst_29 = arith.constant dense<0.000000e+00> : vector<2x64xf32>
    %54 = tpu.matmul %52, %53, %cst_29 {dimension_numbers = #tpu.dot_dimension_numbers<[1], [0], [0], [1], [0, 0, 1, 1], [], []>} : vector<2x4xbf16>, vector<4x64xbf16>, vector<2x64xf32> -> vector<2x64xf32>
    %55 = arith.addf %50, %54 : vector<2x64xf32>
    %c0_30 = arith.constant 0 : index
    %c1152 = arith.constant 1152 : index
    %56 = vector.load %arg9[%c0_30, %c1152] : memref<1x1536xf32, #tpu.memory_space<vmem>>, vector<1x64xf32>
    %57 = vector.broadcast %56 : vector<1x64xf32> to vector<2x64xf32>
    %58 = arith.addf %55, %57 : vector<2x64xf32>
    %cst_31 = arith.constant 0.000000e+00 : f32
    %59 = vector.broadcast %cst_31 : f32 to vector<2x64xf32>
    %60 = arith.maximumf %58, %59 : vector<2x64xf32>
    %61 = arith.truncf %60 : vector<2x64xf32> to vector<2x64xbf16>
    %c0_32 = arith.constant 0 : index
    %c0_33 = arith.constant 0 : index
    %62 = vector.load %arg7[%c0_32, %c0_33] : memref<64x64xbf16, #tpu.memory_space<vmem>>, vector<64x64xbf16>
    %cst_34 = arith.constant dense<0.000000e+00> : vector<2x64xf32>
    %63 = tpu.matmul %61, %62, %cst_34 {dimension_numbers = #tpu.dot_dimension_numbers<[1], [0], [0], [1], [0, 0, 1, 1], [], []>} : vector<2x64xbf16>, vector<64x64xbf16>, vector<2x64xf32> -> vector<2x64xf32>
    %c0_35 = arith.constant 0 : index
    %c1280 = arith.constant 1280 : index
    %64 = vector.load %arg9[%c0_35, %c1280] : memref<1x1536xf32, #tpu.memory_space<vmem>>, vector<1x64xf32>
    %65 = vector.broadcast %64 : vector<1x64xf32> to vector<2x64xf32>
    %66 = arith.addf %63, %65 : vector<2x64xf32>
    %cst_36 = arith.constant 0.000000e+00 : f32
    %67 = vector.broadcast %cst_36 : f32 to vector<2x64xf32>
    %68 = arith.maximumf %66, %67 : vector<2x64xf32>
    %69 = arith.truncf %68 : vector<2x64xf32> to vector<2x64xbf16>
    %c0_37 = arith.constant 0 : index
    %c0_38 = arith.constant 0 : index
    %70 = vector.load %arg8[%c0_37, %c0_38] : memref<64x128xbf16, #tpu.memory_space<vmem>>, vector<64x128xbf16>
    %cst_39 = arith.constant dense<0.000000e+00> : vector<2x128xf32>
    %71 = tpu.matmul %69, %70, %cst_39 {dimension_numbers = #tpu.dot_dimension_numbers<[1], [0], [0], [1], [0, 0, 1, 1], [], []>} : vector<2x64xbf16>, vector<64x128xbf16>, vector<2x128xf32> -> vector<2x128xf32>
    %c0_40 = arith.constant 0 : index
    %c1408 = arith.constant 1408 : index
    %72 = vector.load %arg9[%c0_40, %c1408] : memref<1x1536xf32, #tpu.memory_space<vmem>>, vector<1x128xf32>
    %73 = vector.broadcast %72 : vector<1x128xf32> to vector<2x128xf32>
    %74 = arith.addf %71, %73 : vector<2x128xf32>
    %c0_41 = arith.constant 0 : index
    %c0_42 = arith.constant 0 : index
    %75 = vector.load %arg10[%c0_41, %c0_42] : memref<2x128xf32, #tpu.memory_space<vmem>>, vector<2x128xf32>
    tpu.vector_store %arg10[%c0_41, %c0_42], %74 {strides = array<i32>} : memref<2x128xf32, #tpu.memory_space<vmem>>, vector<2x128xf32>,
    return
  }
}

</mosaic_0001>

<llo_original>
// kernel: critic_forward.1
$region0: #{critic_forward.1}
  #allocation0 [shape = 'u32[]', space=smem, size = 0x4, offset = 0x4, fixed_abs, tag = 'smem constant byte address 0x4 - core index']
  #allocation1 [shape = 'u32[144,128]{1,0:T(1,128)}', space=vmem, size = 0x12000, scoped, tag = 'internal scratch']
  %s0 = inlined_call_operand.vmem [shape: f32[2,1024], index: 0, kind: input, shape index: {}]
  %s1 = inlined_call_operand.vmem [shape: f32[2,4], index: 1, kind: input, shape index: {}]
  %s2 = inlined_call_operand.hbm [shape: bf16[1024,512], index: 2, kind: input, shape index: {}]
  %s3 = inlined_call_operand.hbm [shape: bf16[512,256], index: 3, kind: input, shape index: {}]
  %s4 = inlined_call_operand.vmem [shape: bf16[256,32], index: 4, kind: input, shape index: {}]
  %s5 = inlined_call_operand.vmem [shape: bf16[32,64], index: 5, kind: input, shape index: {}]
  %s6 = inlined_call_operand.vmem [shape: bf16[4,64], index: 6, kind: input, shape index: {}]
  %s7 = inlined_call_operand.vmem [shape: bf16[64,64], index: 7, kind: input, shape index: {}]
  %s8 = inlined_call_operand.vmem [shape: bf16[64,128], index: 8, kind: input, shape index: {}]
  %s9 = inlined_call_operand.vmem [shape: f32[1,1536], index: 9, kind: input, shape index: {}]
  %s10 = inlined_call_operand.vmem [shape: f32[2,128], index: 10, kind: output, shape index: {}]
  %s11 = sld [smem:[#allocation0]]
  $region58: #{critic_forward.1} parent=0
    _
  %s13 = ssub.s32 1, %s11
  %s14 = scalar_select 0, %s13, %s11
  $region1: #{critic_forward.1} parent=0
    #allocation2 [shape = 'u8[1048576]{0}', space=vmem, size = 0x100000, scoped, tag = 'input window, operand 2, single buffered']
    #allocation3 [shape = 's32[1]{0}', space=sflag, size = 0x4, scoped, tag = 'scoped memory for critic_forward.1']
    #allocation4 [shape = 'u8[262144]{0}', space=vmem, size = 0x40000, scoped, tag = 'input window, operand 3, single buffered']
    #allocation5 [shape = 's32[1]{0}', space=sflag, size = 0x4, scoped, tag = 'scoped memory for critic_forward.1']
    %15 = vsyncpa [#allocation3], 0
    %16 = vsyncpa [#allocation5], 0
    // Predicated region
    $region2: #{critic_forward.1} parent=1 // pred_check
      _
    $region3: #{critic_forward.1} parent=1 // pred_check_branch
      %18 = sbr.rel (0) target = $region5
    $region4: #{critic_forward.1} parent=1 // pred_region
      _
    $region5: #{critic_forward.1} parent=1 // pred_fallthru
      _
    // Predicated region
    $region6: #{critic_forward.1} parent=1 // pred_check
      _
    $region7: #{critic_forward.1} parent=1 // pred_check_branch
      %20 = sbr.rel (0) target = $region9
    $region8: #{critic_forward.1} parent=1 // pred_region
      _
    $region9: #{critic_forward.1} parent=1 // pred_fallthru
      _
    // Predicated region
    $region10: #{critic_forward.1} parent=1 // pred_check
      _
    $region11: #{critic_forward.1} parent=1 // pred_check_branch
      %22 = sbr.rel (0) target = $region13
    $region12: #{critic_forward.1} parent=1 // pred_region
      %s24 = ssub.s32 32768, 32768
      %25 = vsyncadd [#allocation3], %s24
      %s26 = sshll.u32 [#allocation2], 4
      %s27 = int_to_ptr.vmem [resolvable:$true] %s26
      %32 = dma.hbm_to_vmem [thread:$0]  %s2, 32768, %s27, [#allocation3], 256, 256, 16
    $region13: #{critic_forward.1} parent=1 // pred_fallthru
      _
    // Predicated region
    $region14: #{critic_forward.1} parent=1 // pred_check
      _
    $region15: #{critic_forward.1} parent=1 // pred_check_branch
      %34 = sbr.rel (0) target = $region17
    $region16: #{critic_forward.1} parent=1 // pred_region
      %s36 = ssub.s32 8192, 8192
      %37 = vsyncadd [#allocation5], %s36
      %s38 = sshll.u32 [#allocation4], 4
      %s39 = int_to_ptr.vmem [resolvable:$true] %s38
      %44 = dma.hbm_to_vmem [thread:$0]  %s3, 8192, %s39, [#allocation5], 128, 128, 8
    $region17: #{critic_forward.1} parent=1 // pred_fallthru
      _
    // Predicated region
    $region18: #{critic_forward.1} parent=1 // pred_check
      _
    $region19: #{critic_forward.1} parent=1 // pred_check_branch
      %46 = sbr.rel (0) target = $region21
    $region20: #{critic_forward.1} parent=1 // pred_region
      _
    $region21: #{critic_forward.1} parent=1 // pred_fallthru
      _
    // Predicated region
    $region22: #{critic_forward.1} parent=1 // pred_check
      _
    $region23: #{critic_forward.1} parent=1 // pred_check_branch
      %48 = sbr.rel (0) target = $region25
    $region24: #{critic_forward.1} parent=1 // pred_region
      _
    $region25: #{critic_forward.1} parent=1 // pred_fallthru
      _
    // Predicated region
    $region26: #{critic_forward.1} parent=1 // pred_check
      _
    $region27: #{critic_forward.1} parent=1 // pred_check_branch
      %50 = sbr.rel (0) target = $region29
    $region28: #{critic_forward.1} parent=1 // pred_region
      _
    $region29: #{critic_forward.1} parent=1 // pred_fallthru
      _
    // Predicated region
    $region30: #{critic_forward.1} parent=1 // pred_check
      _
    $region31: #{critic_forward.1} parent=1 // pred_check_branch
      %52 = sbr.rel (0) target = $region33
    $region32: #{critic_forward.1} parent=1 // pred_region
      _
    $region33: #{critic_forward.1} parent=1 // pred_fallthru
      _
    // Predicated region
    $region34: #{critic_forward.1} parent=1 // pred_check
      _
    $region35: #{critic_forward.1} parent=1 // pred_check_branch
      %54 = sbr.rel (0) target = $region37
    $region36: #{critic_forward.1} parent=1 // pred_region
      _
    $region37: #{critic_forward.1} parent=1 // pred_fallthru
      _
    // Predicated region
    $region38: #{critic_forward.1} parent=1 // pred_check
      _
    $region39: #{critic_forward.1} parent=1 // pred_check_branch
      %56 = sbr.rel (0) target = $region41
    $region40: #{critic_forward.1} parent=1 // pred_region
      _
    $region41: #{critic_forward.1} parent=1 // pred_fallthru
      _
    // Predicated region
    $region42: #{critic_forward.1} parent=1 // pred_check
      _
    $region43: #{critic_forward.1} parent=1 // pred_check_branch
      %58 = sbr.rel (0) target = $region45
    $region44: #{critic_forward.1} parent=1 // pred_region
      %59 = dma.done [#allocation3], 32768
    $region45: #{critic_forward.1} parent=1 // pred_fallthru
      _
    // Predicated region
    $region46: #{critic_forward.1} parent=1 // pred_check
      _
    $region47: #{critic_forward.1} parent=1 // pred_check_branch
      %61 = sbr.rel (0) target = $region49
    $region48: #{critic_forward.1} parent=1 // pred_region
      %62 = dma.done [#allocation5], 8192
    $region49: #{critic_forward.1} parent=1 // pred_fallthru
      _
    %v64 = vld [vmem:[%s0] sm:$0xff]
    %v65 = vld [vmem:[%s0 + $0x8] sm:$0xff]
    %v68 = vcombine.high %v64, %v64
    %v70 = vunpack.c.l.s4 1983009808
    %v71 = vunpack.c.0.s8 %v70
    %v72 = vlaneseq
    %v73 = vshrl.u32 %v72, 7
    %v74 = vsub.s32 %v71, %v73
    %v75 = vrot.slane %v64, %v74
    %v77 = vunpack.c.l.s4 1983009808
    %v78 = vunpack.c.0.s8 %v77
    %v79 = vlaneseq
    %v80 = vshrl.u32 %v79, 7
    %v81 = vsub.s32 %v78, %v80
    %v82 = vrot.slane %v68, %v81
    %v83 = vcombine.high %v75, %v75
    %v84 = vcombine.high %v82, %v82
    %v85 = vcombine.high %v65, %v65
    %v87 = vunpack.c.l.s4 1983009808
    %v88 = vunpack.c.0.s8 %v87
    %v89 = vlaneseq
    %v90 = vshrl.u32 %v89, 7
    %v91 = vsub.s32 %v88, %v90
    %v92 = vrot.slane %v65, %v91
    %v94 = vunpack.c.l.s4 1983009808
    %v95 = vunpack.c.0.s8 %v94
    %v96 = vlaneseq
    %v97 = vshrl.u32 %v96, 7
    %v98 = vsub.s32 %v95, %v97
    %v99 = vrot.slane %v85, %v98
    %v100 = vcombine.high %v92, %v92
    %v101 = vcombine.high %v99, %v99
    %v110 = vpack.c.bf16 %v75, %v75
    %v111 = vpack.c.bf16 %v83, %v83
    %v112 = vpack.c.bf16 %v82, %v82
    %v113 = vpack.c.bf16 %v84, %v84
    %v114 = vpack.c.bf16 %v92, %v92
    %v115 = vpack.c.bf16 %v100, %v100
    %v116 = vpack.c.bf16 %v99, %v99
    %v117 = vpack.c.bf16 %v101, %v101
    %v118 = vld [vmem:[#allocation2] sm:$0xff]
    %v119 = vld [vmem:[#allocation2 + $0x8] sm:$0xff]
    %v120 = vld [vmem:[#allocation2 + $0x10] sm:$0xff]
    %v121 = vld [vmem:[#allocation2 + $0x18] sm:$0xff]
    %v122 = vld [vmem:[#allocation2 + $0x20] sm:$0xff]
    %v123 = vld [vmem:[#allocation2 + $0x28] sm:$0xff]
    %v124 = vld [vmem:[#allocation2 + $0x30] sm:$0xff]
    %v125 = vld [vmem:[#allocation2 + $0x38] sm:$0xff]
    %v126 = vld [vmem:[#allocation2 + $0x40] sm:$0xff]
    %v127 = vld [vmem:[#allocation2 + $0x48] sm:$0xff]
    %v128 = vld [vmem:[#allocation2 + $0x50] sm:$0xff]
    %v129 = vld [vmem:[#allocation2 + $0x58] sm:$0xff]
    %v130 = vld [vmem:[#allocation2 + $0x60] sm:$0xff]
    %v131 = vld [vmem:[#allocation2 + $0x68] sm:$0xff]
    %v132 = vld [vmem:[#allocation2 + $0x70] sm:$0xff]
    %v133 = vld [vmem:[#allocation2 + $0x78] sm:$0xff]
    %v134 = vld [vmem:[#allocation2 + $0x80] sm:$0xff]
    %v135 = vld [vmem:[#allocation2 + $0x88] sm:$0xff]
    %v136 = vld [vmem:[#allocation2 + $0x90] sm:$0xff]
    %v137 = vld [vmem:[#allocation2 + $0x98] sm:$0xff]
    %v138 = vld [vmem:[#allocation2 + $0xa0] sm:$0xff]
    %v139 = vld [vmem:[#allocation2 + $0xa8] sm:$0xff]
    %v140 = vld [vmem:[#allocation2 + $0xb0] sm:$0xff]
    %v141 = vld [vmem:[#allocation2 + $0xb8] sm:$0xff]
    %v142 = vld [vmem:[#allocation2 + $0xc0] sm:$0xff]
    %v143 = vld [vmem:[#allocation2 + $0xc8] sm:$0xff]
    %v144 = vld [vmem:[#allocation2 + $0xd0] sm:$0xff]
    %v145 = vld [vmem:[#allocation2 + $0xd8] sm:$0xff]
    %v146 = vld [vmem:[#allocation2 + $0xe0] sm:$0xff]
    %v147 = vld [vmem:[#allocation2 + $0xe8] sm:$0xff]
    %v148 = vld [vmem:[#allocation2 + $0xf0] sm:$0xff]
    %v149 = vld [vmem:[#allocation2 + $0xf8] sm:$0xff]
    %v150 = vld [vmem:[#allocation2 + $0x100] sm:$0xff]
    %v151 = vld [vmem:[#allocation2 + $0x108] sm:$0xff]
    %v152 = vld [vmem:[#allocation2 + $0x110] sm:$0xff]
    %v153 = vld [vmem:[#allocation2 + $0x118] sm:$0xff]
    %v154 = vld [vmem:[#allocation2 + $0x120] sm:$0xff]
    %v155 = vld [vmem:[#allocation2 + $0x128] sm:$0xff]
    %v156 = vld [vmem:[#allocation2 + $0x130] sm:$0xff]
    %v157 = vld [vmem:[#allocation2 + $0x138] sm:$0xff]
    %v158 = vld [vmem:[#allocation2 + $0x140] sm:$0xff]
    %v159 = vld [vmem:[#allocation2 + $0x148] sm:$0xff]
    %v160 = vld [vmem:[#allocation2 + $0x150] sm:$0xff]
    %v161 = vld [vmem:[#allocation2 + $0x158] sm:$0xff]
    %v162 = vld [vmem:[#allocation2 + $0x160] sm:$0xff]
    %v163 = vld [vmem:[#allocation2 + $0x168] sm:$0xff]
    %v164 = vld [vmem:[#allocation2 + $0x170] sm:$0xff]
    %v165 = vld [vmem:[#allocation2 + $0x178] sm:$0xff]
    %v166 = vld [vmem:[#allocation2 + $0x180] sm:$0xff]
    %v167 = vld [vmem:[#allocation2 + $0x188] sm:$0xff]
    %v168 = vld [vmem:[#allocation2 + $0x190] sm:$0xff]
    %v169 = vld [vmem:[#allocation2 + $0x198] sm:$0xff]
    %v170 = vld [vmem:[#allocation2 + $0x1a0] sm:$0xff]
    %v171 = vld [vmem:[#allocation2 + $0x1a8] sm:$0xff]
    %v172 = vld [vmem:[#allocation2 + $0x1b0] sm:$0xff]
    %v173 = vld [vmem:[#allocation2 + $0x1b8] sm:$0xff]
    %v174 = vld [vmem:[#allocation2 + $0x1c0] sm:$0xff]
    %v175 = vld [vmem:[#allocation2 + $0x1c8] sm:$0xff]
    %v176 = vld [vmem:[#allocation2 + $0x1d0] sm:$0xff]
    %v177 = vld [vmem:[#allocation2 + $0x1d8] sm:$0xff]
    %v178 = vld [vmem:[#allocation2 + $0x1e0] sm:$0xff]
    %v179 = vld [vmem:[#allocation2 + $0x1e8] sm:$0xff]
    %v180 = vld [vmem:[#allocation2 + $0x1f0] sm:$0xff]
    %v181 = vld [vmem:[#allocation2 + $0x1f8] sm:$0xff]
    %v182 = vld [vmem:[#allocation2 + $0x200] sm:$0xff]
    %v183 = vld [vmem:[#allocation2 + $0x208] sm:$0xff]
    %v184 = vld [vmem:[#allocation2 + $0x210] sm:$0xff]
    %v185 = vld [vmem:[#allocation2 + $0x218] sm:$0xff]
    %v186 = vld [vmem:[#allocation2 + $0x220] sm:$0xff]
    %v187 = vld [vmem:[#allocation2 + $0x228] sm:$0xff]
    %v188 = vld [vmem:[#allocation2 + $0x230] sm:$0xff]
    %v189 = vld [vmem:[#allocation2 + $0x238] sm:$0xff]
    %v190 = vld [vmem:[#allocation2 + $0x240] sm:$0xff]
    %v191 = vld [vmem:[#allocation2 + $0x248] sm:$0xff]
    %v192 = vld [vmem:[#allocation2 + $0x250] sm:$0xff]
    %v193 = vld [vmem:[#allocation2 + $0x258] sm:$0xff]
    %v194 = vld [vmem:[#allocation2 + $0x260] sm:$0xff]
    %v195 = vld [vmem:[#allocation2 + $0x268] sm:$0xff]
    %v196 = vld [vmem:[#allocation2 + $0x270] sm:$0xff]
    %v197 = vld [vmem:[#allocation2 + $0x278] sm:$0xff]
    %v198 = vld [vmem:[#allocation2 + $0x280] sm:$0xff]
    %v199 = vld [vmem:[#allocation2 + $0x288] sm:$0xff]
    %v200 = vld [vmem:[#allocation2 + $0x290] sm:$0xff]
    %v201 = vld [vmem:[#allocation2 + $0x298] sm:$0xff]
    %v202 = vld [vmem:[#allocation2 + $0x2a0] sm:$0xff]
    %v203 = vld [vmem:[#allocation2 + $0x2a8] sm:$0xff]
    %v204 = vld [vmem:[#allocation2 + $0x2b0] sm:$0xff]
    %v205 = vld [vmem:[#allocation2 + $0x2b8] sm:$0xff]
    %v206 = vld [vmem:[#allocation2 + $0x2c0] sm:$0xff]
    %v207 = vld [vmem:[#allocation2 + $0x2c8] sm:$0xff]
    %v208 = vld [vmem:[#allocation2 + $0x2d0] sm:$0xff]
    %v209 = vld [vmem:[#allocation2 + $0x2d8] sm:$0xff]
    %v210 = vld [vmem:[#allocation2 + $0x2e0] sm:$0xff]
    %v211 = vld [vmem:[#allocation2 + $0x2e8] sm:$0xff]
    %v212 = vld [vmem:[#allocation2 + $0x2f0] sm:$0xff]
    %v213 = vld [vmem:[#allocation2 + $0x2f8] sm:$0xff]
    %v214 = vld [vmem:[#allocation2 + $0x300] sm:$0xff]
    %v215 = vld [vmem:[#allocation2 + $0x308] sm:$0xff]
    %v216 = vld [vmem:[#allocation2 + $0x310] sm:$0xff]
    %v217 = vld [vmem:[#allocation2 + $0x318] sm:$0xff]
    %v218 = vld [vmem:[#allocation2 + $0x320] sm:$0xff]
    %v219 = vld [vmem:[#allocation2 + $0x328] sm:$0xff]
    %v220 = vld [vmem:[#allocation2 + $0x330] sm:$0xff]
    %v221 = vld [vmem:[#allocation2 + $0x338] sm:$0xff]
    %v222 = vld [vmem:[#allocation2 + $0x340] sm:$0xff]
    %v223 = vld [vmem:[#allocation2 + $0x348] sm:$0xff]
    %v224 = vld [vmem:[#allocation2 + $0x350] sm:$0xff]
    %v225 = vld [vmem:[#allocation2 + $0x358] sm:$0xff]
    %v226 = vld [vmem:[#allocation2 + $0x360] sm:$0xff]
    %v227 = vld [vmem:[#allocation2 + $0x368] sm:$0xff]
    %v228 = vld [vmem:[#allocation2 + $0x370] sm:$0xff]
    %v229 = vld [vmem:[#allocation2 + $0x378] sm:$0xff]
    %v230 = vld [vmem:[#allocation2 + $0x380] sm:$0xff]
    %v231 = vld [vmem:[#allocation2 + $0x388] sm:$0xff]
    %v232 = vld [vmem:[#allocation2 + $0x390] sm:$0xff]
    %v233 = vld [vmem:[#allocation2 + $0x398] sm:$0xff]
    %v234 = vld [vmem:[#allocation2 + $0x3a0] sm:$0xff]
    %v235 = vld [vmem:[#allocation2 + $0x3a8] sm:$0xff]
    %v236 = vld [vmem:[#allocation2 + $0x3b0] sm:$0xff]
    %v237 = vld [vmem:[#allocation2 + $0x3b8] sm:$0xff]
    %v238 = vld [vmem:[#allocation2 + $0x3c0] sm:$0xff]
    %v239 = vld [vmem:[#allocation2 + $0x3c8] sm:$0xff]
    %v240 = vld [vmem:[#allocation2 + $0x3d0] sm:$0xff]
    %v241 = vld [vmem:[#allocation2 + $0x3d8] sm:$0xff]
    %v242 = vld [vmem:[#allocation2 + $0x3e0] sm:$0xff]
    %v243 = vld [vmem:[#allocation2 + $0x3e8] sm:$0xff]
    %v244 = vld [vmem:[#allocation2 + $0x3f0] sm:$0xff]
    %v245 = vld [vmem:[#allocation2 + $0x3f8] sm:$0xff]
    %v246 = vld [vmem:[#allocation2 + $0x400] sm:$0xff]
    %v247 = vld [vmem:[#allocation2 + $0x408] sm:$0xff]
    %v248 = vld [vmem:[#allocation2 + $0x410] sm:$0xff]
    %v249 = vld [vmem:[#allocation2 + $0x418] sm:$0xff]
    %v250 = vld [vmem:[#allocation2 + $0x420] sm:$0xff]
    %v251 = vld [vmem:[#allocation2 + $0x428] sm:$0xff]
    %v252 = vld [vmem:[#allocation2 + $0x430] sm:$0xff]
    %v253 = vld [vmem:[#allocation2 + $0x438] sm:$0xff]
    %v254 = vld [vmem:[#allocation2 + $0x440] sm:$0xff]
    %v255 = vld [vmem:[#allocation2 + $0x448] sm:$0xff]
    %v256 = vld [vmem:[#allocation2 + $0x450] sm:$0xff]
    %v257 = vld [vmem:[#allocation2 + $0x458] sm:$0xff]
    %v258 = vld [vmem:[#allocation2 + $0x460] sm:$0xff]
    %v259 = vld [vmem:[#allocation2 + $0x468] sm:$0xff]
    %v260 = vld [vmem:[#allocation2 + $0x470] sm:$0xff]
    %v261 = vld [vmem:[#allocation2 + $0x478] sm:$0xff]
    %v262 = vld [vmem:[#allocation2 + $0x480] sm:$0xff]
    %v263 = vld [vmem:[#allocation2 + $0x488] sm:$0xff]
    %v264 = vld [vmem:[#allocation2 + $0x490] sm:$0xff]
    %v265 = vld [vmem:[#allocation2 + $0x498] sm:$0xff]
    %v266 = vld [vmem:[#allocation2 + $0x4a0] sm:$0xff]
    %v267 = vld [vmem:[#allocation2 + $0x4a8] sm:$0xff]
    %v268 = vld [vmem:[#allocation2 + $0x4b0] sm:$0xff]
    %v269 = vld [vmem:[#allocation2 + $0x4b8] sm:$0xff]
    %v270 = vld [vmem:[#allocation2 + $0x4c0] sm:$0xff]
    %v271 = vld [vmem:[#allocation2 + $0x4c8] sm:$0xff]
    %v272 = vld [vmem:[#allocation2 + $0x4d0] sm:$0xff]
    %v273 = vld [vmem:[#allocation2 + $0x4d8] sm:$0xff]
    %v274 = vld [vmem:[#allocation2 + $0x4e0] sm:$0xff]
    %v275 = vld [vmem:[#allocation2 + $0x4e8] sm:$0xff]
    %v276 = vld [vmem:[#allocation2 + $0x4f0] sm:$0xff]
    %v277 = vld [vmem:[#allocation2 + $0x4f8] sm:$0xff]
    %v278 = vld [vmem:[#allocation2 + $0x500] sm:$0xff]
    %v279 = vld [vmem:[#allocation2 + $0x508] sm:$0xff]
    %v280 = vld [vmem:[#allocation2 + $0x510] sm:$0xff]
    %v281 = vld [vmem:[#allocation2 + $0x518] sm:$0xff]
    %v282 = vld [vmem:[#allocation2 + $0x520] sm:$0xff]
    %v283 = vld [vmem:[#allocation2 + $0x528] sm:$0xff]
    %v284 = vld [vmem:[#allocation2 + $0x530] sm:$0xff]
    %v285 = vld [vmem:[#allocation2 + $0x538] sm:$0xff]
    %v286 = vld [vmem:[#allocation2 + $0x540] sm:$0xff]
    %v287 = vld [vmem:[#allocation2 + $0x548] sm:$0xff]
    %v288 = vld [vmem:[#allocation2 + $0x550] sm:$0xff]
    %v289 = vld [vmem:[#allocation2 + $0x558] sm:$0xff]
    %v290 = vld [vmem:[#allocation2 + $0x560] sm:$0xff]
    %v291 = vld [vmem:[#allocation2 + $0x568] sm:$0xff]
    %v292 = vld [vmem:[#allocation2 + $0x570] sm:$0xff]
    %v293 = vld [vmem:[#allocation2 + $0x578] sm:$0xff]
    %v294 = vld [vmem:[#allocation2 + $0x580] sm:$0xff]
    %v295 = vld [vmem:[#allocation2 + $0x588] sm:$0xff]
    %v296 = vld [vmem:[#allocation2 + $0x590] sm:$0xff]
    %v297 = vld [vmem:[#allocation2 + $0x598] sm:$0xff]
    %v298 = vld [vmem:[#allocation2 + $0x5a0] sm:$0xff]
    %v299 = vld [vmem:[#allocation2 + $0x5a8] sm:$0xff]
    %v300 = vld [vmem:[#allocation2 + $0x5b0] sm:$0xff]
    %v301 = vld [vmem:[#allocation2 + $0x5b8] sm:$0xff]
    %v302 = vld [vmem:[#allocation2 + $0x5c0] sm:$0xff]
    %v303 = vld [vmem:[#allocation2 + $0x5c8] sm:$0xff]
    %v304 = vld [vmem:[#allocation2 + $0x5d0] sm:$0xff]
    %v305 = vld [vmem:[#allocation2 + $0x5d8] sm:$0xff]
    %v306 = vld [vmem:[#allocation2 + $0x5e0] sm:$0xff]
    %v307 = vld [vmem:[#allocation2 + $0x5e8] sm:$0xff]
    %v308 = vld [vmem:[#allocation2 + $0x5f0] sm:$0xff]
    %v309 = vld [vmem:[#allocation2 + $0x5f8] sm:$0xff]
    %v310 = vld [vmem:[#allocation2 + $0x600] sm:$0xff]
    %v311 = vld [vmem:[#allocation2 + $0x608] sm:$0xff]
    %v312 = vld [vmem:[#allocation2 + $0x610] sm:$0xff]
    %v313 = vld [vmem:[#allocation2 + $0x618] sm:$0xff]
    %v314 = vld [vmem:[#allocation2 + $0x620] sm:$0xff]
    %v315 = vld [vmem:[#allocation2 + $0x628] sm:$0xff]
    %v316 = vld [vmem:[#allocation2 + $0x630] sm:$0xff]
    %v317 = vld [vmem:[#allocation2 + $0x638] sm:$0xff]
    %v318 = vld [vmem:[#allocation2 + $0x640] sm:$0xff]
    %v319 = vld [vmem:[#allocation2 + $0x648] sm:$0xff]
    %v320 = vld [vmem:[#allocation2 + $0x650] sm:$0xff]
    %v321 = vld [vmem:[#allocation2 + $0x658] sm:$0xff]
    %v322 = vld [vmem:[#allocation2 + $0x660] sm:$0xff]
    %v323 = vld [vmem:[#allocation2 + $0x668] sm:$0xff]
    %v324 = vld [vmem:[#allocation2 + $0x670] sm:$0xff]
    %v325 = vld [vmem:[#allocation2 + $0x678] sm:$0xff]
    %v326 = vld [vmem:[#allocation2 + $0x680] sm:$0xff]
    %v327 = vld [vmem:[#allocation2 + $0x688] sm:$0xff]
    %v328 = vld [vmem:[#allocation2 + $0x690] sm:$0xff]
    %v329 = vld [vmem:[#allocation2 + $0x698] sm:$0xff]
    %v330 = vld [vmem:[#allocation2 + $0x6a0] sm:$0xff]
    %v331 = vld [vmem:[#allocation2 + $0x6a8] sm:$0xff]
    %v332 = vld [vmem:[#allocation2 + $0x6b0] sm:$0xff]
    %v333 = vld [vmem:[#allocation2 + $0x6b8] sm:$0xff]
    %v334 = vld [vmem:[#allocation2 + $0x6c0] sm:$0xff]
    %v335 = vld [vmem:[#allocation2 + $0x6c8] sm:$0xff]
    %v336 = vld [vmem:[#allocation2 + $0x6d0] sm:$0xff]
    %v337 = vld [vmem:[#allocation2 + $0x6d8] sm:$0xff]
    %v338 = vld [vmem:[#allocation2 + $0x6e0] sm:$0xff]
    %v339 = vld [vmem:[#allocation2 + $0x6e8] sm:$0xff]
    %v340 = vld [vmem:[#allocation2 + $0x6f0] sm:$0xff]
    %v341 = vld [vmem:[#allocation2 + $0x6f8] sm:$0xff]
    %v342 = vld [vmem:[#allocation2 + $0x700] sm:$0xff]
    %v343 = vld [vmem:[#allocation2 + $0x708] sm:$0xff]
    %v344 = vld [vmem:[#allocation2 + $0x710] sm:$0xff]
    %v345 = vld [vmem:[#allocation2 + $0x718] sm:$0xff]
    %v346 = vld [vmem:[#allocation2 + $0x720] sm:$0xff]
    %v347 = vld [vmem:[#allocation2 + $0x728] sm:$0xff]
    %v348 = vld [vmem:[#allocation2 + $0x730] sm:$0xff]
    %v349 = vld [vmem:[#allocation2 + $0x738] sm:$0xff]
    %v350 = vld [vmem:[#allocation2 + $0x740] sm:$0xff]
    %v351 = vld [vmem:[#allocation2 + $0x748] sm:$0xff]
    %v352 = vld [vmem:[#allocation2 + $0x750] sm:$0xff]
    %v353 = vld [vmem:[#allocation2 + $0x758] sm:$0xff]
    %v354 = vld [vmem:[#allocation2 + $0x760] sm:$0xff]
    %v355 = vld [vmem:[#allocation2 + $0x768] sm:$0xff]
    %v356 = vld [vmem:[#allocation2 + $0x770] sm:$0xff]
    %v357 = vld [vmem:[#allocation2 + $0x778] sm:$0xff]
    %v358 = vld [vmem:[#allocation2 + $0x780] sm:$0xff]
    %v359 = vld [vmem:[#allocation2 + $0x788] sm:$0xff]
    %v360 = vld [vmem:[#allocation2 + $0x790] sm:$0xff]
    %v361 = vld [vmem:[#allocation2 + $0x798] sm:$0xff]
    %v362 = vld [vmem:[#allocation2 + $0x7a0] sm:$0xff]
    %v363 = vld [vmem:[#allocation2 + $0x7a8] sm:$0xff]
    %v364 = vld [vmem:[#allocation2 + $0x7b0] sm:$0xff]
    %v365 = vld [vmem:[#allocation2 + $0x7b8] sm:$0xff]
    %v366 = vld [vmem:[#allocation2 + $0x7c0] sm:$0xff]
    %v367 = vld [vmem:[#allocation2 + $0x7c8] sm:$0xff]
    %v368 = vld [vmem:[#allocation2 + $0x7d0] sm:$0xff]
    %v369 = vld [vmem:[#allocation2 + $0x7d8] sm:$0xff]
    %v370 = vld [vmem:[#allocation2 + $0x7e0] sm:$0xff]
    %v371 = vld [vmem:[#allocation2 + $0x7e8] sm:$0xff]
    %v372 = vld [vmem:[#allocation2 + $0x7f0] sm:$0xff]
    %v373 = vld [vmem:[#allocation2 + $0x7f8] sm:$0xff]
    %v374 = vld [vmem:[%s9] sm:$0xf]
    %v376 = vlaneseq
    %v377 = vshrl.u32 %v376, 7
    %v378 = vsub.s32 0, %v377
    %v379 = vrot.slane %v374, %v378
    %v380 = vlaneseq
    %v381 = vshrl.u32 %v380, 7
    %v382 = vsub.s32 1, %v381
    %v383 = vrot.slane %v374, %v382
    %v384 = vlaneseq
    %v385 = vshrl.u32 %v384, 7
    %v386 = vsub.s32 2, %v385
    %v387 = vrot.slane %v374, %v386
    %v388 = vlaneseq
    %v389 = vshrl.u32 %v388, 7
    %v390 = vsub.s32 3, %v389
    %v391 = vrot.slane %v374, %v390
    %v652 = vunpack.c.l.b16 %v118
    %v653 = vunpack.c.h.b16 %v118
    %v654 = vunpack.c.l.b16 %v119
    %v655 = vunpack.c.h.b16 %v119
    %v656 = vunpack.c.l.b16 %v120
    %v657 = vunpack.c.h.b16 %v120
    %v658 = vunpack.c.l.b16 %v121
    %v659 = vunpack.c.h.b16 %v121
    %v660 = vunpack.c.l.b16 %v122
    %v661 = vunpack.c.h.b16 %v122
    %v662 = vunpack.c.l.b16 %v123
    %v663 = vunpack.c.h.b16 %v123
    %v664 = vunpack.c.l.b16 %v124
    %v665 = vunpack.c.h.b16 %v124
    %v666 = vunpack.c.l.b16 %v125
    %v667 = vunpack.c.h.b16 %v125
    %v668 = vunpack.c.l.b16 %v126
    %v669 = vunpack.c.h.b16 %v126
    %v670 = vunpack.c.l.b16 %v127
    %v671 = vunpack.c.h.b16 %v127
    %v672 = vunpack.c.l.b16 %v128
    %v673 = vunpack.c.h.b16 %v128
    %v674 = vunpack.c.l.b16 %v129
    %v675 = vunpack.c.h.b16 %v129
    %v676 = vunpack.c.l.b16 %v130
    %v677 = vunpack.c.h.b16 %v130
    %v678 = vunpack.c.l.b16 %v131
    %v679 = vunpack.c.h.b16 %v131
    %v680 = vunpack.c.l.b16 %v132
    %v681 = vunpack.c.h.b16 %v132
    %v682 = vunpack.c.l.b16 %v133
    %v683 = vunpack.c.h.b16 %v133
    %v684 = vunpack.c.l.b16 %v134
    %v685 = vunpack.c.h.b16 %v134
    %v686 = vunpack.c.l.b16 %v135
    %v687 = vunpack.c.h.b16 %v135
    %v688 = vunpack.c.l.b16 %v136
    %v689 = vunpack.c.h.b16 %v136
    %v690 = vunpack.c.l.b16 %v137
    %v691 = vunpack.c.h.b16 %v137
    %v692 = vunpack.c.l.b16 %v138
    %v693 = vunpack.c.h.b16 %v138
    %v694 = vunpack.c.l.b16 %v139
    %v695 = vunpack.c.h.b16 %v139
    %v696 = vunpack.c.l.b16 %v140
    %v697 = vunpack.c.h.b16 %v140
    %v698 = vunpack.c.l.b16 %v141
    %v699 = vunpack.c.h.b16 %v141
    %v700 = vunpack.c.l.b16 %v142
    %v701 = vunpack.c.h.b16 %v142
    %v702 = vunpack.c.l.b16 %v143
    %v703 = vunpack.c.h.b16 %v143
    %v704 = vunpack.c.l.b16 %v144
    %v705 = vunpack.c.h.b16 %v144
    %v706 = vunpack.c.l.b16 %v145
    %v707 = vunpack.c.h.b16 %v145
    %v708 = vunpack.c.l.b16 %v146
    %v709 = vunpack.c.h.b16 %v146
    %v710 = vunpack.c.l.b16 %v147
    %v711 = vunpack.c.h.b16 %v147
    %v712 = vunpack.c.l.b16 %v148
    %v713 = vunpack.c.h.b16 %v148
    %v714 = vunpack.c.l.b16 %v149
    %v715 = vunpack.c.h.b16 %v149
    %v716 = vunpack.c.l.b16 %v150
    %v717 = vunpack.c.h.b16 %v150
    %v718 = vunpack.c.l.b16 %v151
    %v719 = vunpack.c.h.b16 %v151
    %v720 = vunpack.c.l.b16 %v152
    %v721 = vunpack.c.h.b16 %v152
    %v722 = vunpack.c.l.b16 %v153
    %v723 = vunpack.c.h.b16 %v153
    %v724 = vunpack.c.l.b16 %v154
    %v725 = vunpack.c.h.b16 %v154
    %v726 = vunpack.c.l.b16 %v155
    %v727 = vunpack.c.h.b16 %v155
    %v728 = vunpack.c.l.b16 %v156
    %v729 = vunpack.c.h.b16 %v156
    %v730 = vunpack.c.l.b16 %v157
    %v731 = vunpack.c.h.b16 %v157
    %v732 = vunpack.c.l.b16 %v158
    %v733 = vunpack.c.h.b16 %v158
    %v734 = vunpack.c.l.b16 %v159
    %v735 = vunpack.c.h.b16 %v159
    %v736 = vunpack.c.l.b16 %v160
    %v737 = vunpack.c.h.b16 %v160
    %v738 = vunpack.c.l.b16 %v161
    %v739 = vunpack.c.h.b16 %v161
    %v740 = vunpack.c.l.b16 %v162
    %v741 = vunpack.c.h.b16 %v162
    %v742 = vunpack.c.l.b16 %v163
    %v743 = vunpack.c.h.b16 %v163
    %v744 = vunpack.c.l.b16 %v164
    %v745 = vunpack.c.h.b16 %v164
    %v746 = vunpack.c.l.b16 %v165
    %v747 = vunpack.c.h.b16 %v165
    %v748 = vunpack.c.l.b16 %v166
    %v749 = vunpack.c.h.b16 %v166
    %v750 = vunpack.c.l.b16 %v167
    %v751 = vunpack.c.h.b16 %v167
    %v752 = vunpack.c.l.b16 %v168
    %v753 = vunpack.c.h.b16 %v168
    %v754 = vunpack.c.l.b16 %v169
    %v755 = vunpack.c.h.b16 %v169
    %v756 = vunpack.c.l.b16 %v170
    %v757 = vunpack.c.h.b16 %v170
    %v758 = vunpack.c.l.b16 %v171
    %v759 = vunpack.c.h.b16 %v171
    %v760 = vunpack.c.l.b16 %v172
    %v761 = vunpack.c.h.b16 %v172
    %v762 = vunpack.c.l.b16 %v173
    %v763 = vunpack.c.h.b16 %v173
    %v764 = vunpack.c.l.b16 %v174
    %v765 = vunpack.c.h.b16 %v174
    %v766 = vunpack.c.l.b16 %v175
    %v767 = vunpack.c.h.b16 %v175
    %v768 = vunpack.c.l.b16 %v176
    %v769 = vunpack.c.h.b16 %v176
    %v770 = vunpack.c.l.b16 %v177
    %v771 = vunpack.c.h.b16 %v177
    %v772 = vunpack.c.l.b16 %v178
    %v773 = vunpack.c.h.b16 %v178
    %v774 = vunpack.c.l.b16 %v179
    %v775 = vunpack.c.h.b16 %v179
    %v776 = vunpack.c.l.b16 %v180
    %v777 = vunpack.c.h.b16 %v180
    %v778 = vunpack.c.l.b16 %v181
    %v779 = vunpack.c.h.b16 %v181
    %v780 = vunpack.c.l.b16 %v182
    %v781 = vunpack.c.h.b16 %v182
    %v782 = vunpack.c.l.b16 %v183
    %v783 = vunpack.c.h.b16 %v183
    %v784 = vunpack.c.l.b16 %v184
    %v785 = vunpack.c.h.b16 %v184
    %v786 = vunpack.c.l.b16 %v185
    %v787 = vunpack.c.h.b16 %v185
    %v788 = vunpack.c.l.b16 %v186
    %v789 = vunpack.c.h.b16 %v186
    %v790 = vunpack.c.l.b16 %v187
    %v791 = vunpack.c.h.b16 %v187
    %v792 = vunpack.c.l.b16 %v188
    %v793 = vunpack.c.h.b16 %v188
    %v794 = vunpack.c.l.b16 %v189
    %v795 = vunpack.c.h.b16 %v189
    %v796 = vunpack.c.l.b16 %v190
    %v797 = vunpack.c.h.b16 %v190
    %v798 = vunpack.c.l.b16 %v191
    %v799 = vunpack.c.h.b16 %v191
    %v800 = vunpack.c.l.b16 %v192
    %v801 = vunpack.c.h.b16 %v192
    %v802 = vunpack.c.l.b16 %v193
    %v803 = vunpack.c.h.b16 %v193
    %v804 = vunpack.c.l.b16 %v194
    %v805 = vunpack.c.h.b16 %v194
    %v806 = vunpack.c.l.b16 %v195
    %v807 = vunpack.c.h.b16 %v195
    %v808 = vunpack.c.l.b16 %v196
    %v809 = vunpack.c.h.b16 %v196
    %v810 = vunpack.c.l.b16 %v197
    %v811 = vunpack.c.h.b16 %v197
    %v812 = vunpack.c.l.b16 %v198
    %v813 = vunpack.c.h.b16 %v198
    %v814 = vunpack.c.l.b16 %v199
    %v815 = vunpack.c.h.b16 %v199
    %v816 = vunpack.c.l.b16 %v200
    %v817 = vunpack.c.h.b16 %v200
    %v818 = vunpack.c.l.b16 %v201
    %v819 = vunpack.c.h.b16 %v201
    %v820 = vunpack.c.l.b16 %v202
    %v821 = vunpack.c.h.b16 %v202
    %v822 = vunpack.c.l.b16 %v203
    %v823 = vunpack.c.h.b16 %v203
    %v824 = vunpack.c.l.b16 %v204
    %v825 = vunpack.c.h.b16 %v204
    %v826 = vunpack.c.l.b16 %v205
    %v827 = vunpack.c.h.b16 %v205
    %v828 = vunpack.c.l.b16 %v206
    %v829 = vunpack.c.h.b16 %v206
    %v830 = vunpack.c.l.b16 %v207
    %v831 = vunpack.c.h.b16 %v207
    %v832 = vunpack.c.l.b16 %v208
    %v833 = vunpack.c.h.b16 %v208
    %v834 = vunpack.c.l.b16 %v209
    %v835 = vunpack.c.h.b16 %v209
    %v836 = vunpack.c.l.b16 %v210
    %v837 = vunpack.c.h.b16 %v210
    %v838 = vunpack.c.l.b16 %v211
    %v839 = vunpack.c.h.b16 %v211
    %v840 = vunpack.c.l.b16 %v212
    %v841 = vunpack.c.h.b16 %v212
    %v842 = vunpack.c.l.b16 %v213
    %v843 = vunpack.c.h.b16 %v213
    %v844 = vunpack.c.l.b16 %v214
    %v845 = vunpack.c.h.b16 %v214
    %v846 = vunpack.c.l.b16 %v215
    %v847 = vunpack.c.h.b16 %v215
    %v848 = vunpack.c.l.b16 %v216
    %v849 = vunpack.c.h.b16 %v216
    %v850 = vunpack.c.l.b16 %v217
    %v851 = vunpack.c.h.b16 %v217
    %v852 = vunpack.c.l.b16 %v218
    %v853 = vunpack.c.h.b16 %v218
    %v854 = vunpack.c.l.b16 %v219
    %v855 = vunpack.c.h.b16 %v219
    %v856 = vunpack.c.l.b16 %v220
    %v857 = vunpack.c.h.b16 %v220
    %v858 = vunpack.c.l.b16 %v221
    %v859 = vunpack.c.h.b16 %v221
    %v860 = vunpack.c.l.b16 %v222
    %v861 = vunpack.c.h.b16 %v222
    %v862 = vunpack.c.l.b16 %v223
    %v863 = vunpack.c.h.b16 %v223
    %v864 = vunpack.c.l.b16 %v224
    %v865 = vunpack.c.h.b16 %v224
    %v866 = vunpack.c.l.b16 %v225
    %v867 = vunpack.c.h.b16 %v225
    %v868 = vunpack.c.l.b16 %v226
    %v869 = vunpack.c.h.b16 %v226
    %v870 = vunpack.c.l.b16 %v227
    %v871 = vunpack.c.h.b16 %v227
    %v872 = vunpack.c.l.b16 %v228
    %v873 = vunpack.c.h.b16 %v228
    %v874 = vunpack.c.l.b16 %v229
    %v875 = vunpack.c.h.b16 %v229
    %v876 = vunpack.c.l.b16 %v230
    %v877 = vunpack.c.h.b16 %v230
    %v878 = vunpack.c.l.b16 %v231
    %v879 = vunpack.c.h.b16 %v231
    %v880 = vunpack.c.l.b16 %v232
    %v881 = vunpack.c.h.b16 %v232
    %v882 = vunpack.c.l.b16 %v233
    %v883 = vunpack.c.h.b16 %v233
    %v884 = vunpack.c.l.b16 %v234
    %v885 = vunpack.c.h.b16 %v234
    %v886 = vunpack.c.l.b16 %v235
    %v887 = vunpack.c.h.b16 %v235
    %v888 = vunpack.c.l.b16 %v236
    %v889 = vunpack.c.h.b16 %v236
    %v890 = vunpack.c.l.b16 %v237
    %v891 = vunpack.c.h.b16 %v237
    %v892 = vunpack.c.l.b16 %v238
    %v893 = vunpack.c.h.b16 %v238
    %v894 = vunpack.c.l.b16 %v239
    %v895 = vunpack.c.h.b16 %v239
    %v896 = vunpack.c.l.b16 %v240
    %v897 = vunpack.c.h.b16 %v240
    %v898 = vunpack.c.l.b16 %v241
    %v899 = vunpack.c.h.b16 %v241
    %v900 = vunpack.c.l.b16 %v242
    %v901 = vunpack.c.h.b16 %v242
    %v902 = vunpack.c.l.b16 %v243
    %v903 = vunpack.c.h.b16 %v243
    %v904 = vunpack.c.l.b16 %v244
    %v905 = vunpack.c.h.b16 %v244
    %v906 = vunpack.c.l.b16 %v245
    %v907 = vunpack.c.h.b16 %v245
    %v908 = vunpack.c.l.b16 %v246
    %v909 = vunpack.c.h.b16 %v246
    %v910 = vunpack.c.l.b16 %v247
    %v911 = vunpack.c.h.b16 %v247
    %v912 = vunpack.c.l.b16 %v248
    %v913 = vunpack.c.h.b16 %v248
    %v914 = vunpack.c.l.b16 %v249
    %v915 = vunpack.c.h.b16 %v249
    %v916 = vunpack.c.l.b16 %v250
    %v917 = vunpack.c.h.b16 %v250
    %v918 = vunpack.c.l.b16 %v251
    %v919 = vunpack.c.h.b16 %v251
    %v920 = vunpack.c.l.b16 %v252
    %v921 = vunpack.c.h.b16 %v252
    %v922 = vunpack.c.l.b16 %v253
    %v923 = vunpack.c.h.b16 %v253
    %v924 = vunpack.c.l.b16 %v254
    %v925 = vunpack.c.h.b16 %v254
    %v926 = vunpack.c.l.b16 %v255
    %v927 = vunpack.c.h.b16 %v255
    %v928 = vunpack.c.l.b16 %v256
    %v929 = vunpack.c.h.b16 %v256
    %v930 = vunpack.c.l.b16 %v257
    %v931 = vunpack.c.h.b16 %v257
    %v932 = vunpack.c.l.b16 %v258
    %v933 = vunpack.c.h.b16 %v258
    %v934 = vunpack.c.l.b16 %v259
    %v935 = vunpack.c.h.b16 %v259
    %v936 = vunpack.c.l.b16 %v260
    %v937 = vunpack.c.h.b16 %v260
    %v938 = vunpack.c.l.b16 %v261
    %v939 = vunpack.c.h.b16 %v261
    %v940 = vunpack.c.l.b16 %v262
    %v941 = vunpack.c.h.b16 %v262
    %v942 = vunpack.c.l.b16 %v263
    %v943 = vunpack.c.h.b16 %v263
    %v944 = vunpack.c.l.b16 %v264
    %v945 = vunpack.c.h.b16 %v264
    %v946 = vunpack.c.l.b16 %v265
    %v947 = vunpack.c.h.b16 %v265
    %v948 = vunpack.c.l.b16 %v266
    %v949 = vunpack.c.h.b16 %v266
    %v950 = vunpack.c.l.b16 %v267
    %v951 = vunpack.c.h.b16 %v267
    %v952 = vunpack.c.l.b16 %v268
    %v953 = vunpack.c.h.b16 %v268
    %v954 = vunpack.c.l.b16 %v269
    %v955 = vunpack.c.h.b16 %v269
    %v956 = vunpack.c.l.b16 %v270
    %v957 = vunpack.c.h.b16 %v270
    %v958 = vunpack.c.l.b16 %v271
    %v959 = vunpack.c.h.b16 %v271
    %v960 = vunpack.c.l.b16 %v272
    %v961 = vunpack.c.h.b16 %v272
    %v962 = vunpack.c.l.b16 %v273
    %v963 = vunpack.c.h.b16 %v273
    %v964 = vunpack.c.l.b16 %v274
    %v965 = vunpack.c.h.b16 %v274
    %v966 = vunpack.c.l.b16 %v275
    %v967 = vunpack.c.h.b16 %v275
    %v968 = vunpack.c.l.b16 %v276
    %v969 = vunpack.c.h.b16 %v276
    %v970 = vunpack.c.l.b16 %v277
    %v971 = vunpack.c.h.b16 %v277
    %v972 = vunpack.c.l.b16 %v278
    %v973 = vunpack.c.h.b16 %v278
    %v974 = vunpack.c.l.b16 %v279
    %v975 = vunpack.c.h.b16 %v279
    %v976 = vunpack.c.l.b16 %v280
    %v977 = vunpack.c.h.b16 %v280
    %v978 = vunpack.c.l.b16 %v281
    %v979 = vunpack.c.h.b16 %v281
    %v980 = vunpack.c.l.b16 %v282
    %v981 = vunpack.c.h.b16 %v282
    %v982 = vunpack.c.l.b16 %v283
    %v983 = vunpack.c.h.b16 %v283
    %v984 = vunpack.c.l.b16 %v284
    %v985 = vunpack.c.h.b16 %v284
    %v986 = vunpack.c.l.b16 %v285
    %v987 = vunpack.c.h.b16 %v285
    %v988 = vunpack.c.l.b16 %v286
    %v989 = vunpack.c.h.b16 %v286
    %v990 = vunpack.c.l.b16 %v287
    %v991 = vunpack.c.h.b16 %v287
    %v992 = vunpack.c.l.b16 %v288
    %v993 = vunpack.c.h.b16 %v288
    %v994 = vunpack.c.l.b16 %v289
    %v995 = vunpack.c.h.b16 %v289
    %v996 = vunpack.c.l.b16 %v290
    %v997 = vunpack.c.h.b16 %v290
    %v998 = vunpack.c.l.b16 %v291
    %v999 = vunpack.c.h.b16 %v291
    %v1000 = vunpack.c.l.b16 %v292
    %v1001 = vunpack.c.h.b16 %v292
    %v1002 = vunpack.c.l.b16 %v293
    %v1003 = vunpack.c.h.b16 %v293
    %v1004 = vunpack.c.l.b16 %v294
    %v1005 = vunpack.c.h.b16 %v294
    %v1006 = vunpack.c.l.b16 %v295
    %v1007 = vunpack.c.h.b16 %v295
    %v1008 = vunpack.c.l.b16 %v296
    %v1009 = vunpack.c.h.b16 %v296
    %v1010 = vunpack.c.l.b16 %v297
    %v1011 = vunpack.c.h.b16 %v297
    %v1012 = vunpack.c.l.b16 %v298
    %v1013 = vunpack.c.h.b16 %v298
    %v1014 = vunpack.c.l.b16 %v299
    %v1015 = vunpack.c.h.b16 %v299
    %v1016 = vunpack.c.l.b16 %v300
    %v1017 = vunpack.c.h.b16 %v300
    %v1018 = vunpack.c.l.b16 %v301
    %v1019 = vunpack.c.h.b16 %v301
    %v1020 = vunpack.c.l.b16 %v302
    %v1021 = vunpack.c.h.b16 %v302
    %v1022 = vunpack.c.l.b16 %v303
    %v1023 = vunpack.c.h.b16 %v303
    %v1024 = vunpack.c.l.b16 %v304
    %v1025 = vunpack.c.h.b16 %v304
    %v1026 = vunpack.c.l.b16 %v305
    %v1027 = vunpack.c.h.b16 %v305
    %v1028 = vunpack.c.l.b16 %v306
    %v1029 = vunpack.c.h.b16 %v306
    %v1030 = vunpack.c.l.b16 %v307
    %v1031 = vunpack.c.h.b16 %v307
    %v1032 = vunpack.c.l.b16 %v308
    %v1033 = vunpack.c.h.b16 %v308
    %v1034 = vunpack.c.l.b16 %v309
    %v1035 = vunpack.c.h.b16 %v309
    %v1036 = vunpack.c.l.b16 %v310
    %v1037 = vunpack.c.h.b16 %v310
    %v1038 = vunpack.c.l.b16 %v311
    %v1039 = vunpack.c.h.b16 %v311
    %v1040 = vunpack.c.l.b16 %v312
    %v1041 = vunpack.c.h.b16 %v312
    %v1042 = vunpack.c.l.b16 %v313
    %v1043 = vunpack.c.h.b16 %v313
    %v1044 = vunpack.c.l.b16 %v314
    %v1045 = vunpack.c.h.b16 %v314
    %v1046 = vunpack.c.l.b16 %v315
    %v1047 = vunpack.c.h.b16 %v315
    %v1048 = vunpack.c.l.b16 %v316
    %v1049 = vunpack.c.h.b16 %v316
    %v1050 = vunpack.c.l.b16 %v317
    %v1051 = vunpack.c.h.b16 %v317
    %v1052 = vunpack.c.l.b16 %v318
    %v1053 = vunpack.c.h.b16 %v318
    %v1054 = vunpack.c.l.b16 %v319
    %v1055 = vunpack.c.h.b16 %v319
    %v1056 = vunpack.c.l.b16 %v320
    %v1057 = vunpack.c.h.b16 %v320
    %v1058 = vunpack.c.l.b16 %v321
    %v1059 = vunpack.c.h.b16 %v321
    %v1060 = vunpack.c.l.b16 %v322
    %v1061 = vunpack.c.h.b16 %v322
    %v1062 = vunpack.c.l.b16 %v323
    %v1063 = vunpack.c.h.b16 %v323
    %v1064 = vunpack.c.l.b16 %v324
    %v1065 = vunpack.c.h.b16 %v324
    %v1066 = vunpack.c.l.b16 %v325
    %v1067 = vunpack.c.h.b16 %v325
    %v1068 = vunpack.c.l.b16 %v326
    %v1069 = vunpack.c.h.b16 %v326
    %v1070 = vunpack.c.l.b16 %v327
    %v1071 = vunpack.c.h.b16 %v327
    %v1072 = vunpack.c.l.b16 %v328
    %v1073 = vunpack.c.h.b16 %v328
    %v1074 = vunpack.c.l.b16 %v329
    %v1075 = vunpack.c.h.b16 %v329
    %v1076 = vunpack.c.l.b16 %v330
    %v1077 = vunpack.c.h.b16 %v330
    %v1078 = vunpack.c.l.b16 %v331
    %v1079 = vunpack.c.h.b16 %v331
    %v1080 = vunpack.c.l.b16 %v332
    %v1081 = vunpack.c.h.b16 %v332
    %v1082 = vunpack.c.l.b16 %v333
    %v1083 = vunpack.c.h.b16 %v333
    %v1084 = vunpack.c.l.b16 %v334
    %v1085 = vunpack.c.h.b16 %v334
    %v1086 = vunpack.c.l.b16 %v335
    %v1087 = vunpack.c.h.b16 %v335
    %v1088 = vunpack.c.l.b16 %v336
    %v1089 = vunpack.c.h.b16 %v336
    %v1090 = vunpack.c.l.b16 %v337
    %v1091 = vunpack.c.h.b16 %v337
    %v1092 = vunpack.c.l.b16 %v338
    %v1093 = vunpack.c.h.b16 %v338
    %v1094 = vunpack.c.l.b16 %v339
    %v1095 = vunpack.c.h.b16 %v339
    %v1096 = vunpack.c.l.b16 %v340
    %v1097 = vunpack.c.h.b16 %v340
    %v1098 = vunpack.c.l.b16 %v341
    %v1099 = vunpack.c.h.b16 %v341
    %v1100 = vunpack.c.l.b16 %v342
    %v1101 = vunpack.c.h.b16 %v342
    %v1102 = vunpack.c.l.b16 %v343
    %v1103 = vunpack.c.h.b16 %v343
    %v1104 = vunpack.c.l.b16 %v344
    %v1105 = vunpack.c.h.b16 %v344
    %v1106 = vunpack.c.l.b16 %v345
    %v1107 = vunpack.c.h.b16 %v345
    %v1108 = vunpack.c.l.b16 %v346
    %v1109 = vunpack.c.h.b16 %v346
    %v1110 = vunpack.c.l.b16 %v347
    %v1111 = vunpack.c.h.b16 %v347
    %v1112 = vunpack.c.l.b16 %v348
    %v1113 = vunpack.c.h.b16 %v348
    %v1114 = vunpack.c.l.b16 %v349
    %v1115 = vunpack.c.h.b16 %v349
    %v1116 = vunpack.c.l.b16 %v350
    %v1117 = vunpack.c.h.b16 %v350
    %v1118 = vunpack.c.l.b16 %v351
    %v1119 = vunpack.c.h.b16 %v351
    %v1120 = vunpack.c.l.b16 %v352
    %v1121 = vunpack.c.h.b16 %v352
    %v1122 = vunpack.c.l.b16 %v353
    %v1123 = vunpack.c.h.b16 %v353
    %v1124 = vunpack.c.l.b16 %v354
    %v1125 = vunpack.c.h.b16 %v354
    %v1126 = vunpack.c.l.b16 %v355
    %v1127 = vunpack.c.h.b16 %v355
    %v1128 = vunpack.c.l.b16 %v356
    %v1129 = vunpack.c.h.b16 %v356
    %v1130 = vunpack.c.l.b16 %v357
    %v1131 = vunpack.c.h.b16 %v357
    %v1132 = vunpack.c.l.b16 %v358
    %v1133 = vunpack.c.h.b16 %v358
    %v1134 = vunpack.c.l.b16 %v359
    %v1135 = vunpack.c.h.b16 %v359
    %v1136 = vunpack.c.l.b16 %v360
    %v1137 = vunpack.c.h.b16 %v360
    %v1138 = vunpack.c.l.b16 %v361
    %v1139 = vunpack.c.h.b16 %v361
    %v1140 = vunpack.c.l.b16 %v362
    %v1141 = vunpack.c.h.b16 %v362
    %v1142 = vunpack.c.l.b16 %v363
    %v1143 = vunpack.c.h.b16 %v363
    %v1144 = vunpack.c.l.b16 %v364
    %v1145 = vunpack.c.h.b16 %v364
    %v1146 = vunpack.c.l.b16 %v365
    %v1147 = vunpack.c.h.b16 %v365
    %v1148 = vunpack.c.l.b16 %v366
    %v1149 = vunpack.c.h.b16 %v366
    %v1150 = vunpack.c.l.b16 %v367
    %v1151 = vunpack.c.h.b16 %v367
    %v1152 = vunpack.c.l.b16 %v368
    %v1153 = vunpack.c.h.b16 %v368
    %v1154 = vunpack.c.l.b16 %v369
    %v1155 = vunpack.c.h.b16 %v369
    %v1156 = vunpack.c.l.b16 %v370
    %v1157 = vunpack.c.h.b16 %v370
    %v1158 = vunpack.c.l.b16 %v371
    %v1159 = vunpack.c.h.b16 %v371
    %v1160 = vunpack.c.l.b16 %v372
    %v1161 = vunpack.c.h.b16 %v372
    %v1162 = vunpack.c.l.b16 %v373
    %v1163 = vunpack.c.h.b16 %v373
    %v1164 = vpack.c.b16 %v656, %v652
    %v1165 = vpack.c.b16 %v657, %v653
    %v1166 = vpack.c.b16 %v658, %v654
    %v1167 = vpack.c.b16 %v659, %v655
    %v1168 = vpack.c.b16 %v664, %v660
    %v1169 = vpack.c.b16 %v665, %v661
    %v1170 = vpack.c.b16 %v666, %v662
    %v1171 = vpack.c.b16 %v667, %v663
    %v1172 = vpack.c.b16 %v672, %v668
    %v1173 = vpack.c.b16 %v673, %v669
    %v1174 = vpack.c.b16 %v674, %v670
    %v1175 = vpack.c.b16 %v675, %v671
    %v1176 = vpack.c.b16 %v680, %v676
    %v1177 = vpack.c.b16 %v681, %v677
    %v1178 = vpack.c.b16 %v682, %v678
    %v1179 = vpack.c.b16 %v683, %v679
    %v1180 = vpack.c.b16 %v688, %v684
    %v1181 = vpack.c.b16 %v689, %v685
    %v1182 = vpack.c.b16 %v690, %v686
    %v1183 = vpack.c.b16 %v691, %v687
    %v1184 = vpack.c.b16 %v696, %v692
    %v1185 = vpack.c.b16 %v697, %v693
    %v1186 = vpack.c.b16 %v698, %v694
    %v1187 = vpack.c.b16 %v699, %v695
    %v1188 = vpack.c.b16 %v704, %v700
    %v1189 = vpack.c.b16 %v705, %v701
    %v1190 = vpack.c.b16 %v706, %v702
    %v1191 = vpack.c.b16 %v707, %v703
    %v1192 = vpack.c.b16 %v712, %v708
    %v1193 = vpack.c.b16 %v713, %v709
    %v1194 = vpack.c.b16 %v714, %v710
    %v1195 = vpack.c.b16 %v715, %v711
    %v1196 = vpack.c.b16 %v720, %v716
    %v1197 = vpack.c.b16 %v721, %v717
    %v1198 = vpack.c.b16 %v722, %v718
    %v1199 = vpack.c.b16 %v723, %v719
    %v1200 = vpack.c.b16 %v728, %v724
    %v1201 = vpack.c.b16 %v729, %v725
    %v1202 = vpack.c.b16 %v730, %v726
    %v1203 = vpack.c.b16 %v731, %v727
    %v1204 = vpack.c.b16 %v736, %v732
    %v1205 = vpack.c.b16 %v737, %v733
    %v1206 = vpack.c.b16 %v738, %v734
    %v1207 = vpack.c.b16 %v739, %v735
    %v1208 = vpack.c.b16 %v744, %v740
    %v1209 = vpack.c.b16 %v745, %v741
    %v1210 = vpack.c.b16 %v746, %v742
    %v1211 = vpack.c.b16 %v747, %v743
    %v1212 = vpack.c.b16 %v752, %v748
    %v1213 = vpack.c.b16 %v753, %v749
    %v1214 = vpack.c.b16 %v754, %v750
    %v1215 = vpack.c.b16 %v755, %v751
    %v1216 = vpack.c.b16 %v760, %v756
    %v1217 = vpack.c.b16 %v761, %v757
    %v1218 = vpack.c.b16 %v762, %v758
    %v1219 = vpack.c.b16 %v763, %v759
    %v1220 = vpack.c.b16 %v768, %v764
    %v1221 = vpack.c.b16 %v769, %v765
    %v1222 = vpack.c.b16 %v770, %v766
    %v1223 = vpack.c.b16 %v771, %v767
    %v1224 = vpack.c.b16 %v776, %v772
    %v1225 = vpack.c.b16 %v777, %v773
    %v1226 = vpack.c.b16 %v778, %v774
    %v1227 = vpack.c.b16 %v779, %v775
    %v1228 = vpack.c.b16 %v784, %v780
    %v1229 = vpack.c.b16 %v785, %v781
    %v1230 = vpack.c.b16 %v786, %v782
    %v1231 = vpack.c.b16 %v787, %v783
    %v1232 = vpack.c.b16 %v792, %v788
    %v1233 = vpack.c.b16 %v793, %v789
    %v1234 = vpack.c.b16 %v794, %v790
    %v1235 = vpack.c.b16 %v795, %v791
    %v1236 = vpack.c.b16 %v800, %v796
    %v1237 = vpack.c.b16 %v801, %v797
    %v1238 = vpack.c.b16 %v802, %v798
    %v1239 = vpack.c.b16 %v803, %v799
    %v1240 = vpack.c.b16 %v808, %v804
    %v1241 = vpack.c.b16 %v809, %v805
    %v1242 = vpack.c.b16 %v810, %v806
    %v1243 = vpack.c.b16 %v811, %v807
    %v1244 = vpack.c.b16 %v816, %v812
    %v1245 = vpack.c.b16 %v817, %v813
    %v1246 = vpack.c.b16 %v818, %v814
    %v1247 = vpack.c.b16 %v819, %v815
    %v1248 = vpack.c.b16 %v824, %v820
    %v1249 = vpack.c.b16 %v825, %v821
    %v1250 = vpack.c.b16 %v826, %v822
    %v1251 = vpack.c.b16 %v827, %v823
    %v1252 = vpack.c.b16 %v832, %v828
    %v1253 = vpack.c.b16 %v833, %v829
    %v1254 = vpack.c.b16 %v834, %v830
    %v1255 = vpack.c.b16 %v835, %v831
    %v1256 = vpack.c.b16 %v840, %v836
    %v1257 = vpack.c.b16 %v841, %v837
    %v1258 = vpack.c.b16 %v842, %v838
    %v1259 = vpack.c.b16 %v843, %v839
    %v1260 = vpack.c.b16 %v848, %v844
    %v1261 = vpack.c.b16 %v849, %v845
    %v1262 = vpack.c.b16 %v850, %v846
    %v1263 = vpack.c.b16 %v851, %v847
    %v1264 = vpack.c.b16 %v856, %v852
    %v1265 = vpack.c.b16 %v857, %v853
    %v1266 = vpack.c.b16 %v858, %v854
    %v1267 = vpack.c.b16 %v859, %v855
    %v1268 = vpack.c.b16 %v864, %v860
    %v1269 = vpack.c.b16 %v865, %v861
    %v1270 = vpack.c.b16 %v866, %v862
    %v1271 = vpack.c.b16 %v867, %v863
    %v1272 = vpack.c.b16 %v872, %v868
    %v1273 = vpack.c.b16 %v873, %v869
    %v1274 = vpack.c.b16 %v874, %v870
    %v1275 = vpack.c.b16 %v875, %v871
    %v1276 = vpack.c.b16 %v880, %v876
    %v1277 = vpack.c.b16 %v881, %v877
    %v1278 = vpack.c.b16 %v882, %v878
    %v1279 = vpack.c.b16 %v883, %v879
    %v1280 = vpack.c.b16 %v888, %v884
    %v1281 = vpack.c.b16 %v889, %v885
    %v1282 = vpack.c.b16 %v890, %v886
    %v1283 = vpack.c.b16 %v891, %v887
    %v1284 = vpack.c.b16 %v896, %v892
    %v1285 = vpack.c.b16 %v897, %v893
    %v1286 = vpack.c.b16 %v898, %v894
    %v1287 = vpack.c.b16 %v899, %v895
    %v1288 = vpack.c.b16 %v904, %v900
    %v1289 = vpack.c.b16 %v905, %v901
    %v1290 = vpack.c.b16 %v906, %v902
    %v1291 = vpack.c.b16 %v907, %v903
    %v1292 = vpack.c.b16 %v912, %v908
    %v1293 = vpack.c.b16 %v913, %v909
    %v1294 = vpack.c.b16 %v914, %v910
    %v1295 = vpack.c.b16 %v915, %v911
    %v1296 = vpack.c.b16 %v920, %v916
    %v1297 = vpack.c.b16 %v921, %v917
    %v1298 = vpack.c.b16 %v922, %v918
    %v1299 = vpack.c.b16 %v923, %v919
    %v1300 = vpack.c.b16 %v928, %v924
    %v1301 = vpack.c.b16 %v929, %v925
    %v1302 = vpack.c.b16 %v930, %v926
    %v1303 = vpack.c.b16 %v931, %v927
    %v1304 = vpack.c.b16 %v936, %v932
    %v1305 = vpack.c.b16 %v937, %v933
    %v1306 = vpack.c.b16 %v938, %v934
    %v1307 = vpack.c.b16 %v939, %v935
    %v1308 = vpack.c.b16 %v944, %v940
    %v1309 = vpack.c.b16 %v945, %v941
    %v1310 = vpack.c.b16 %v946, %v942
    %v1311 = vpack.c.b16 %v947, %v943
    %v1312 = vpack.c.b16 %v952, %v948
    %v1313 = vpack.c.b16 %v953, %v949
    %v1314 = vpack.c.b16 %v954, %v950
    %v1315 = vpack.c.b16 %v955, %v951
    %v1316 = vpack.c.b16 %v960, %v956
    %v1317 = vpack.c.b16 %v961, %v957
    %v1318 = vpack.c.b16 %v962, %v958
    %v1319 = vpack.c.b16 %v963, %v959
    %v1320 = vpack.c.b16 %v968, %v964
    %v1321 = vpack.c.b16 %v969, %v965
    %v1322 = vpack.c.b16 %v970, %v966
    %v1323 = vpack.c.b16 %v971, %v967
    %v1324 = vpack.c.b16 %v976, %v972
    %v1325 = vpack.c.b16 %v977, %v973
    %v1326 = vpack.c.b16 %v978, %v974
    %v1327 = vpack.c.b16 %v979, %v975
    %v1328 = vpack.c.b16 %v984, %v980
    %v1329 = vpack.c.b16 %v985, %v981
    %v1330 = vpack.c.b16 %v986, %v982
    %v1331 = vpack.c.b16 %v987, %v983
    %v1332 = vpack.c.b16 %v992, %v988
    %v1333 = vpack.c.b16 %v993, %v989
    %v1334 = vpack.c.b16 %v994, %v990
    %v1335 = vpack.c.b16 %v995, %v991
    %v1336 = vpack.c.b16 %v1000, %v996
    %v1337 = vpack.c.b16 %v1001, %v997
    %v1338 = vpack.c.b16 %v1002, %v998
    %v1339 = vpack.c.b16 %v1003, %v999
    %v1340 = vpack.c.b16 %v1008, %v1004
    %v1341 = vpack.c.b16 %v1009, %v1005
    %v1342 = vpack.c.b16 %v1010, %v1006
    %v1343 = vpack.c.b16 %v1011, %v1007
    %v1344 = vpack.c.b16 %v1016, %v1012
    %v1345 = vpack.c.b16 %v1017, %v1013
    %v1346 = vpack.c.b16 %v1018, %v1014
    %v1347 = vpack.c.b16 %v1019, %v1015
    %v1348 = vpack.c.b16 %v1024, %v1020
    %v1349 = vpack.c.b16 %v1025, %v1021
    %v1350 = vpack.c.b16 %v1026, %v1022
    %v1351 = vpack.c.b16 %v1027, %v1023
    %v1352 = vpack.c.b16 %v1032, %v1028
    %v1353 = vpack.c.b16 %v1033, %v1029
    %v1354 = vpack.c.b16 %v1034, %v1030
    %v1355 = vpack.c.b16 %v1035, %v1031
    %v1356 = vpack.c.b16 %v1040, %v1036
    %v1357 = vpack.c.b16 %v1041, %v1037
    %v1358 = vpack.c.b16 %v1042, %v1038
    %v1359 = vpack.c.b16 %v1043, %v1039
    %v1360 = vpack.c.b16 %v1048, %v1044
    %v1361 = vpack.c.b16 %v1049, %v1045
    %v1362 = vpack.c.b16 %v1050, %v1046
    %v1363 = vpack.c.b16 %v1051, %v1047
    %v1364 = vpack.c.b16 %v1056, %v1052
    %v1365 = vpack.c.b16 %v1057, %v1053
    %v1366 = vpack.c.b16 %v1058, %v1054
    %v1367 = vpack.c.b16 %v1059, %v1055
    %v1368 = vpack.c.b16 %v1064, %v1060
    %v1369 = vpack.c.b16 %v1065, %v1061
    %v1370 = vpack.c.b16 %v1066, %v1062
    %v1371 = vpack.c.b16 %v1067, %v1063
    %v1372 = vpack.c.b16 %v1072, %v1068
    %v1373 = vpack.c.b16 %v1073, %v1069
    %v1374 = vpack.c.b16 %v1074, %v1070
    %v1375 = vpack.c.b16 %v1075, %v1071
    %v1376 = vpack.c.b16 %v1080, %v1076
    %v1377 = vpack.c.b16 %v1081, %v1077
    %v1378 = vpack.c.b16 %v1082, %v1078
    %v1379 = vpack.c.b16 %v1083, %v1079
    %v1380 = vpack.c.b16 %v1088, %v1084
    %v1381 = vpack.c.b16 %v1089, %v1085
    %v1382 = vpack.c.b16 %v1090, %v1086
    %v1383 = vpack.c.b16 %v1091, %v1087
    %v1384 = vpack.c.b16 %v1096, %v1092
    %v1385 = vpack.c.b16 %v1097, %v1093
    %v1386 = vpack.c.b16 %v1098, %v1094
    %v1387 = vpack.c.b16 %v1099, %v1095
    %v1388 = vpack.c.b16 %v1104, %v1100
    %v1389 = vpack.c.b16 %v1105, %v1101
    %v1390 = vpack.c.b16 %v1106, %v1102
    %v1391 = vpack.c.b16 %v1107, %v1103
    %v1392 = vpack.c.b16 %v1112, %v1108
    %v1393 = vpack.c.b16 %v1113, %v1109
    %v1394 = vpack.c.b16 %v1114, %v1110
    %v1395 = vpack.c.b16 %v1115, %v1111
    %v1396 = vpack.c.b16 %v1120, %v1116
    %v1397 = vpack.c.b16 %v1121, %v1117
    %v1398 = vpack.c.b16 %v1122, %v1118
    %v1399 = vpack.c.b16 %v1123, %v1119
    %v1400 = vpack.c.b16 %v1128, %v1124
    %v1401 = vpack.c.b16 %v1129, %v1125
    %v1402 = vpack.c.b16 %v1130, %v1126
    %v1403 = vpack.c.b16 %v1131, %v1127
    %v1404 = vpack.c.b16 %v1136, %v1132
    %v1405 = vpack.c.b16 %v1137, %v1133
    %v1406 = vpack.c.b16 %v1138, %v1134
    %v1407 = vpack.c.b16 %v1139, %v1135
    %v1408 = vpack.c.b16 %v1144, %v1140
    %v1409 = vpack.c.b16 %v1145, %v1141
    %v1410 = vpack.c.b16 %v1146, %v1142
    %v1411 = vpack.c.b16 %v1147, %v1143
    %v1412 = vpack.c.b16 %v1152, %v1148
    %v1413 = vpack.c.b16 %v1153, %v1149
    %v1414 = vpack.c.b16 %v1154, %v1150
    %v1415 = vpack.c.b16 %v1155, %v1151
    %v1416 = vpack.c.b16 %v1160, %v1156
    %v1417 = vpack.c.b16 %v1161, %v1157
    %v1418 = vpack.c.b16 %v1162, %v1158
    %v1419 = vpack.c.b16 %v1163, %v1159
    %1676 = vmatprep.subr.bf16.mxu0 %v1193
    %1677 = vmatpush1.bf16.msra.mxu0 %v1192
    %1678 = vmatprep.subr.bf16.mxu0 %v1189
    %1679 = vmatpush1.bf16.msra.mxu0 %v1188
    %1680 = vmatprep.subr.bf16.mxu0 %v1185
    %1681 = vmatpush1.bf16.msra.mxu0 %v1184
    %1682 = vmatprep.subr.bf16.mxu0 %v1181
    %1683 = vmatpush1.bf16.msra.mxu0 %v1180
    %1684 = vmatprep.subr.bf16.mxu0 %v1177
    %1685 = vmatpush1.bf16.msra.mxu0 %v1176
    %1686 = vmatprep.subr.bf16.mxu0 %v1173
    %1687 = vmatpush1.bf16.msra.mxu0 %v1172
    %1688 = vmatprep.subr.bf16.mxu0 %v1169
    %1689 = vmatpush1.bf16.msra.mxu0 %v1168
    %1690 = vmatprep.subr.bf16.mxu0 %v1165
    %1691 = vmatpush1.bf16.msra.mxu0 %v1164
    %1692 = vmatprep.subr.bf16.mxu0 %v1225
    %1693 = vmatpush2.bf16.msra.mxu0 %v1224
    %1694 = vmatprep.subr.bf16.mxu0 %v1221
    %1695 = vmatpush2.bf16.msra.mxu0 %v1220
    %1696 = vmatprep.subr.bf16.mxu0 %v1217
    %1697 = vmatpush2.bf16.msra.mxu0 %v1216
    %1698 = vmatprep.subr.bf16.mxu0 %v1213
    %1699 = vmatpush2.bf16.msra.mxu0 %v1212
    %1700 = vmatprep.subr.bf16.mxu0 %v1209
    %1701 = vmatpush2.bf16.msra.mxu0 %v1208
    %1702 = vmatprep.subr.bf16.mxu0 %v1205
    %1703 = vmatpush2.bf16.msra.mxu0 %v1204
    %1704 = vmatprep.subr.bf16.mxu0 %v1201
    %1705 = vmatpush2.bf16.msra.mxu0 %v1200
    %1706 = vmatprep.subr.bf16.mxu0 %v1197
    %1707 = vmatpush2.bf16.msra.mxu0 %v1196
    %1708 = vmatprep.mubr.bf16.mxu0 %v111
    %1709 = vmatmul.mubr.bf16.gmra.mxu0 %v110
    %v1710 = vpop.f32.mrf.mxu0
    %v1711 = vadd.f32 %v379, %v1710
    %v1712 = vpop.f32.mrf.mxu0
    %v1713 = vadd.f32 %v383, %v1712
    %v1714 = vpop.f32.mrf.mxu0
    %v1715 = vpop.f32.mrf.mxu0
    %1716 = vdwg.mxu0
    %1717 = vmatprep.subr.bf16.mxu0 %v1257
    %1718 = vmatpush1.bf16.msra.mxu0 %v1256
    %1719 = vmatprep.subr.bf16.mxu0 %v1253
    %1720 = vmatpush1.bf16.msra.mxu0 %v1252
    %1721 = vmatprep.subr.bf16.mxu0 %v1249
    %1722 = vmatpush1.bf16.msra.mxu0 %v1248
    %1723 = vmatprep.subr.bf16.mxu0 %v1245
    %1724 = vmatpush1.bf16.msra.mxu0 %v1244
    %1725 = vmatprep.subr.bf16.mxu0 %v1241
    %1726 = vmatpush1.bf16.msra.mxu0 %v1240
    %1727 = vmatprep.subr.bf16.mxu0 %v1237
    %1728 = vmatpush1.bf16.msra.mxu0 %v1236
    %1729 = vmatprep.subr.bf16.mxu0 %v1233
    %1730 = vmatpush1.bf16.msra.mxu0 %v1232
    %1731 = vmatprep.subr.bf16.mxu0 %v1229
    %1732 = vmatpush1.bf16.msra.mxu0 %v1228
    %1733 = vmatprep.subr.bf16.mxu0 %v1289
    %1734 = vmatpush2.bf16.msra.mxu0 %v1288
    %1735 = vmatprep.subr.bf16.mxu0 %v1285
    %1736 = vmatpush2.bf16.msra.mxu0 %v1284
    %1737 = vmatprep.subr.bf16.mxu0 %v1281
    %1738 = vmatpush2.bf16.msra.mxu0 %v1280
    %1739 = vmatprep.subr.bf16.mxu0 %v1277
    %1740 = vmatpush2.bf16.msra.mxu0 %v1276
    %1741 = vmatprep.subr.bf16.mxu0 %v1273
    %1742 = vmatpush2.bf16.msra.mxu0 %v1272
    %1743 = vmatprep.subr.bf16.mxu0 %v1269
    %1744 = vmatpush2.bf16.msra.mxu0 %v1268
    %1745 = vmatprep.subr.bf16.mxu0 %v1265
    %1746 = vmatpush2.bf16.msra.mxu0 %v1264
    %1747 = vmatprep.subr.bf16.mxu0 %v1261
    %1748 = vmatpush2.bf16.msra.mxu0 %v1260
    %1749 = vmatprep.mubr.bf16.mxu0 %v113
    %1750 = vmatmul.mubr.bf16.gmra.mxu0 %v112
    %v1751 = vpop.f32.mrf.mxu0
    %v1752 = vadd.f32 %v1711, %v1751
    %v1753 = vpop.f32.mrf.mxu0
    %v1754 = vadd.f32 %v1713, %v1753
    %v1755 = vpop.f32.mrf.mxu0
    %v1756 = vpop.f32.mrf.mxu0
    %1757 = vdwg.mxu0
    %1758 = vmatprep.subr.bf16.mxu0 %v1321
    %1759 = vmatpush1.bf16.msra.mxu0 %v1320
    %1760 = vmatprep.subr.bf16.mxu0 %v1317
    %1761 = vmatpush1.bf16.msra.mxu0 %v1316
    %1762 = vmatprep.subr.bf16.mxu0 %v1313
    %1763 = vmatpush1.bf16.msra.mxu0 %v1312
    %1764 = vmatprep.subr.bf16.mxu0 %v1309
    %1765 = vmatpush1.bf16.msra.mxu0 %v1308
    %1766 = vmatprep.subr.bf16.mxu0 %v1305
    %1767 = vmatpush1.bf16.msra.mxu0 %v1304
    %1768 = vmatprep.subr.bf16.mxu0 %v1301
    %1769 = vmatpush1.bf16.msra.mxu0 %v1300
    %1770 = vmatprep.subr.bf16.mxu0 %v1297
    %1771 = vmatpush1.bf16.msra.mxu0 %v1296
    %1772 = vmatprep.subr.bf16.mxu0 %v1293
    %1773 = vmatpush1.bf16.msra.mxu0 %v1292
    %1774 = vmatprep.subr.bf16.mxu0 %v1353
    %1775 = vmatpush2.bf16.msra.mxu0 %v1352
    %1776 = vmatprep.subr.bf16.mxu0 %v1349
    %1777 = vmatpush2.bf16.msra.mxu0 %v1348
    %1778 = vmatprep.subr.bf16.mxu0 %v1345
    %1779 = vmatpush2.bf16.msra.mxu0 %v1344
    %1780 = vmatprep.subr.bf16.mxu0 %v1341
    %1781 = vmatpush2.bf16.msra.mxu0 %v1340
    %1782 = vmatprep.subr.bf16.mxu0 %v1337
    %1783 = vmatpush2.bf16.msra.mxu0 %v1336
    %1784 = vmatprep.subr.bf16.mxu0 %v1333
    %1785 = vmatpush2.bf16.msra.mxu0 %v1332
    %1786 = vmatprep.subr.bf16.mxu0 %v1329
    %1787 = vmatpush2.bf16.msra.mxu0 %v1328
    %1788 = vmatprep.subr.bf16.mxu0 %v1325
    %1789 = vmatpush2.bf16.msra.mxu0 %v1324
    %1790 = vmatprep.mubr.bf16.mxu0 %v115
    %1791 = vmatmul.mubr.bf16.gmra.mxu0 %v114
    %v1792 = vpop.f32.mrf.mxu0
    %v1793 = vadd.f32 %v1752, %v1792
    %v1794 = vpop.f32.mrf.mxu0
    %v1795 = vadd.f32 %v1754, %v1794
    %v1796 = vpop.f32.mrf.mxu0
    %v1797 = vpop.f32.mrf.mxu0
    %1798 = vdwg.mxu0
    %1799 = vmatprep.subr.bf16.mxu0 %v1385
    %1800 = vmatpush1.bf16.msra.mxu0 %v1384
    %1801 = vmatprep.subr.bf16.mxu0 %v1381
    %1802 = vmatpush1.bf16.msra.mxu0 %v1380
    %1803 = vmatprep.subr.bf16.mxu0 %v1377
    %1804 = vmatpush1.bf16.msra.mxu0 %v1376
    %1805 = vmatprep.subr.bf16.mxu0 %v1373
    %1806 = vmatpush1.bf16.msra.mxu0 %v1372
    %1807 = vmatprep.subr.bf16.mxu0 %v1369
    %1808 = vmatpush1.bf16.msra.mxu0 %v1368
    %1809 = vmatprep.subr.bf16.mxu0 %v1365
    %1810 = vmatpush1.bf16.msra.mxu0 %v1364
    %1811 = vmatprep.subr.bf16.mxu0 %v1361
    %1812 = vmatpush1.bf16.msra.mxu0 %v1360
    %1813 = vmatprep.subr.bf16.mxu0 %v1357
    %1814 = vmatpush1.bf16.msra.mxu0 %v1356
    %1815 = vmatprep.subr.bf16.mxu0 %v1417
    %1816 = vmatpush2.bf16.msra.mxu0 %v1416
    %1817 = vmatprep.subr.bf16.mxu0 %v1413
    %1818 = vmatpush2.bf16.msra.mxu0 %v1412
    %1819 = vmatprep.subr.bf16.mxu0 %v1409
    %1820 = vmatpush2.bf16.msra.mxu0 %v1408
    %1821 = vmatprep.subr.bf16.mxu0 %v1405
    %1822 = vmatpush2.bf16.msra.mxu0 %v1404
    %1823 = vmatprep.subr.bf16.mxu0 %v1401
    %1824 = vmatpush2.bf16.msra.mxu0 %v1400
    %1825 = vmatprep.subr.bf16.mxu0 %v1397
    %1826 = vmatpush2.bf16.msra.mxu0 %v1396
    %1827 = vmatprep.subr.bf16.mxu0 %v1393
    %1828 = vmatpush2.bf16.msra.mxu0 %v1392
    %1829 = vmatprep.subr.bf16.mxu0 %v1389
    %1830 = vmatpush2.bf16.msra.mxu0 %v1388
    %1831 = vmatprep.mubr.bf16.mxu0 %v117
    %1832 = vmatmul.mubr.bf16.gmra.mxu0 %v116
    %v1833 = vpop.f32.mrf.mxu0
    %v1834 = vadd.f32 %v1793, %v1833
    %v1835 = vpop.f32.mrf.mxu0
    %v1836 = vadd.f32 %v1795, %v1835
    %v1837 = vpop.f32.mrf.mxu0
    %v1838 = vpop.f32.mrf.mxu0
    %1839 = vdwg.mxu0
    %1840 = vmatprep.subr.bf16.mxu0 %v1195
    %1841 = vmatpush1.bf16.msra.mxu0 %v1194
    %1842 = vmatprep.subr.bf16.mxu0 %v1191
    %1843 = vmatpush1.bf16.msra.mxu0 %v1190
    %1844 = vmatprep.subr.bf16.mxu0 %v1187
    %1845 = vmatpush1.bf16.msra.mxu0 %v1186
    %1846 = vmatprep.subr.bf16.mxu0 %v1183
    %1847 = vmatpush1.bf16.msra.mxu0 %v1182
    %1848 = vmatprep.subr.bf16.mxu0 %v1179
    %1849 = vmatpush1.bf16.msra.mxu0 %v1178
    %1850 = vmatprep.subr.bf16.mxu0 %v1175
    %1851 = vmatpush1.bf16.msra.mxu0 %v1174
    %1852 = vmatprep.subr.bf16.mxu0 %v1171
    %1853 = vmatpush1.bf16.msra.mxu0 %v1170
    %1854 = vmatprep.subr.bf16.mxu0 %v1167
    %1855 = vmatpush1.bf16.msra.mxu0 %v1166
    %1856 = vmatprep.subr.bf16.mxu0 %v1227
    %1857 = vmatpush2.bf16.msra.mxu0 %v1226
    %1858 = vmatprep.subr.bf16.mxu0 %v1223
    %1859 = vmatpush2.bf16.msra.mxu0 %v1222
    %1860 = vmatprep.subr.bf16.mxu0 %v1219
    %1861 = vmatpush2.bf16.msra.mxu0 %v1218
    %1862 = vmatprep.subr.bf16.mxu0 %v1215
    %1863 = vmatpush2.bf16.msra.mxu0 %v1214
    %1864 = vmatprep.subr.bf16.mxu0 %v1211
    %1865 = vmatpush2.bf16.msra.mxu0 %v1210
    %1866 = vmatprep.subr.bf16.mxu0 %v1207
    %1867 = vmatpush2.bf16.msra.mxu0 %v1206
    %1868 = vmatprep.subr.bf16.mxu0 %v1203
    %1869 = vmatpush2.bf16.msra.mxu0 %v1202
    %1870 = vmatprep.subr.bf16.mxu0 %v1199
    %1871 = vmatpush2.bf16.msra.mxu0 %v1198
    %1872 = vmatprep.mubr.bf16.mxu0 %v111
    %1873 = vmatmul.mubr.bf16.gmra.mxu0 %v110
    %v1874 = vpop.f32.mrf.mxu0
    %v1875 = vadd.f32 %v387, %v1874
    %v1876 = vpop.f32.mrf.mxu0
    %v1877 = vadd.f32 %v391, %v1876
    %v1878 = vpop.f32.mrf.mxu0
    %v1879 = vpop.f32.mrf.mxu0
    %1880 = vdwg.mxu0
    %1881 = vmatprep.subr.bf16.mxu0 %v1259
    %1882 = vmatpush1.bf16.msra.mxu0 %v1258
    %1883 = vmatprep.subr.bf16.mxu0 %v1255
    %1884 = vmatpush1.bf16.msra.mxu0 %v1254
    %1885 = vmatprep.subr.bf16.mxu0 %v1251
    %1886 = vmatpush1.bf16.msra.mxu0 %v1250
    %1887 = vmatprep.subr.bf16.mxu0 %v1247
    %1888 = vmatpush1.bf16.msra.mxu0 %v1246
    %1889 = vmatprep.subr.bf16.mxu0 %v1243
    %1890 = vmatpush1.bf16.msra.mxu0 %v1242
    %1891 = vmatprep.subr.bf16.mxu0 %v1239
    %1892 = vmatpush1.bf16.msra.mxu0 %v1238
    %1893 = vmatprep.subr.bf16.mxu0 %v1235
    %1894 = vmatpush1.bf16.msra.mxu0 %v1234
    %1895 = vmatprep.subr.bf16.mxu0 %v1231
    %1896 = vmatpush1.bf16.msra.mxu0 %v1230
    %1897 = vmatprep.subr.bf16.mxu0 %v1291
    %1898 = vmatpush2.bf16.msra.mxu0 %v1290
    %1899 = vmatprep.subr.bf16.mxu0 %v1287
    %1900 = vmatpush2.bf16.msra.mxu0 %v1286
    %1901 = vmatprep.subr.bf16.mxu0 %v1283
    %1902 = vmatpush2.bf16.msra.mxu0 %v1282
    %1903 = vmatprep.subr.bf16.mxu0 %v1279
    %1904 = vmatpush2.bf16.msra.mxu0 %v1278
    %1905 = vmatprep.subr.bf16.mxu0 %v1275
    %1906 = vmatpush2.bf16.msra.mxu0 %v1274
    %1907 = vmatprep.subr.bf16.mxu0 %v1271
    %1908 = vmatpush2.bf16.msra.mxu0 %v1270
    %1909 = vmatprep.subr.bf16.mxu0 %v1267
    %1910 = vmatpush2.bf16.msra.mxu0 %v1266
    %1911 = vmatprep.subr.bf16.mxu0 %v1263
    %1912 = vmatpush2.bf16.msra.mxu0 %v1262
    %1913 = vmatprep.mubr.bf16.mxu0 %v113
    %1914 = vmatmul.mubr.bf16.gmra.mxu0 %v112
    %v1915 = vpop.f32.mrf.mxu0
    %v1916 = vadd.f32 %v1875, %v1915
    %v1917 = vpop.f32.mrf.mxu0
    %v1918 = vadd.f32 %v1877, %v1917
    %v1919 = vpop.f32.mrf.mxu0
    %v1920 = vpop.f32.mrf.mxu0
    %1921 = vdwg.mxu0
    %1922 = vmatprep.subr.bf16.mxu0 %v1323
    %1923 = vmatpush1.bf16.msra.mxu0 %v1322
    %1924 = vmatprep.subr.bf16.mxu0 %v1319
    %1925 = vmatpush1.bf16.msra.mxu0 %v1318
    %1926 = vmatprep.subr.bf16.mxu0 %v1315
    %1927 = vmatpush1.bf16.msra.mxu0 %v1314
    %1928 = vmatprep.subr.bf16.mxu0 %v1311
    %1929 = vmatpush1.bf16.msra.mxu0 %v1310
    %1930 = vmatprep.subr.bf16.mxu0 %v1307
    %1931 = vmatpush1.bf16.msra.mxu0 %v1306
    %1932 = vmatprep.subr.bf16.mxu0 %v1303
    %1933 = vmatpush1.bf16.msra.mxu0 %v1302
    %1934 = vmatprep.subr.bf16.mxu0 %v1299
    %1935 = vmatpush1.bf16.msra.mxu0 %v1298
    %1936 = vmatprep.subr.bf16.mxu0 %v1295
    %1937 = vmatpush1.bf16.msra.mxu0 %v1294
    %1938 = vmatprep.subr.bf16.mxu0 %v1355
    %1939 = vmatpush2.bf16.msra.mxu0 %v1354
    %1940 = vmatprep.subr.bf16.mxu0 %v1351
    %1941 = vmatpush2.bf16.msra.mxu0 %v1350
    %1942 = vmatprep.subr.bf16.mxu0 %v1347
    %1943 = vmatpush2.bf16.msra.mxu0 %v1346
    %1944 = vmatprep.subr.bf16.mxu0 %v1343
    %1945 = vmatpush2.bf16.msra.mxu0 %v1342
    %1946 = vmatprep.subr.bf16.mxu0 %v1339
    %1947 = vmatpush2.bf16.msra.mxu0 %v1338
    %1948 = vmatprep.subr.bf16.mxu0 %v1335
    %1949 = vmatpush2.bf16.msra.mxu0 %v1334
    %1950 = vmatprep.subr.bf16.mxu0 %v1331
    %1951 = vmatpush2.bf16.msra.mxu0 %v1330
    %1952 = vmatprep.subr.bf16.mxu0 %v1327
    %1953 = vmatpush2.bf16.msra.mxu0 %v1326
    %1954 = vmatprep.mubr.bf16.mxu0 %v115
    %1955 = vmatmul.mubr.bf16.gmra.mxu0 %v114
    %v1956 = vpop.f32.mrf.mxu0
    %v1957 = vadd.f32 %v1916, %v1956
    %v1958 = vpop.f32.mrf.mxu0
    %v1959 = vadd.f32 %v1918, %v1958
    %v1960 = vpop.f32.mrf.mxu0
    %v1961 = vpop.f32.mrf.mxu0
    %1962 = vdwg.mxu0
    %1963 = vmatprep.subr.bf16.mxu0 %v1387
    %1964 = vmatpush1.bf16.msra.mxu0 %v1386
    %1965 = vmatprep.subr.bf16.mxu0 %v1383
    %1966 = vmatpush1.bf16.msra.mxu0 %v1382
    %1967 = vmatprep.subr.bf16.mxu0 %v1379
    %1968 = vmatpush1.bf16.msra.mxu0 %v1378
    %1969 = vmatprep.subr.bf16.mxu0 %v1375
    %1970 = vmatpush1.bf16.msra.mxu0 %v1374
    %1971 = vmatprep.subr.bf16.mxu0 %v1371
    %1972 = vmatpush1.bf16.msra.mxu0 %v1370
    %1973 = vmatprep.subr.bf16.mxu0 %v1367
    %1974 = vmatpush1.bf16.msra.mxu0 %v1366
    %1975 = vmatprep.subr.bf16.mxu0 %v1363
    %1976 = vmatpush1.bf16.msra.mxu0 %v1362
    %1977 = vmatprep.subr.bf16.mxu0 %v1359
    %1978 = vmatpush1.bf16.msra.mxu0 %v1358
    %1979 = vmatprep.subr.bf16.mxu0 %v1419
    %1980 = vmatpush2.bf16.msra.mxu0 %v1418
    %1981 = vmatprep.subr.bf16.mxu0 %v1415
    %1982 = vmatpush2.bf16.msra.mxu0 %v1414
    %1983 = vmatprep.subr.bf16.mxu0 %v1411
    %1984 = vmatpush2.bf16.msra.mxu0 %v1410
    %1985 = vmatprep.subr.bf16.mxu0 %v1407
    %1986 = vmatpush2.bf16.msra.mxu0 %v1406
    %1987 = vmatprep.subr.bf16.mxu0 %v1403
    %1988 = vmatpush2.bf16.msra.mxu0 %v1402
    %1989 = vmatprep.subr.bf16.mxu0 %v1399
    %1990 = vmatpush2.bf16.msra.mxu0 %v1398
    %1991 = vmatprep.subr.bf16.mxu0 %v1395
    %1992 = vmatpush2.bf16.msra.mxu0 %v1394
    %1993 = vmatprep.subr.bf16.mxu0 %v1391
    %1994 = vmatpush2.bf16.msra.mxu0 %v1390
    %1995 = vmatprep.mubr.bf16.mxu0 %v117
    %1996 = vmatmul.mubr.bf16.gmra.mxu0 %v116
    %v1997 = vpop.f32.mrf.mxu0
    %v1998 = vadd.f32 %v1957, %v1997
    %v1999 = vpop.f32.mrf.mxu0
    %v2000 = vadd.f32 %v1959, %v1999
    %v2001 = vpop.f32.mrf.mxu0
    %v2002 = vpop.f32.mrf.mxu0
    %2003 = vdwg.mxu0
    %v2004 = vmax.f32 %v1834, 0.0
    %v2005 = vmax.f32 %v1836, 0.0
    %v2006 = vmax.f32 %v1998, 0.0
    %v2007 = vmax.f32 %v2000, 0.0
    %v2008 = vpack.c.bf16 %v2004, %v2004
    %v2009 = vpack.c.bf16 %v2005, %v2005
    %v2010 = vpack.c.bf16 %v2006, %v2006
    %v2011 = vpack.c.bf16 %v2007, %v2007
    %v2012 = vld [vmem:[#allocation4] sm:$0xff]
    %v2013 = vld [vmem:[#allocation4 + $0x8] sm:$0xff]
    %v2014 = vld [vmem:[#allocation4 + $0x10] sm:$0xff]
    %v2015 = vld [vmem:[#allocation4 + $0x18] sm:$0xff]
    %v2016 = vld [vmem:[#allocation4 + $0x20] sm:$0xff]
    %v2017 = vld [vmem:[#allocation4 + $0x28] sm:$0xff]
    %v2018 = vld [vmem:[#allocation4 + $0x30] sm:$0xff]
    %v2019 = vld [vmem:[#allocation4 + $0x38] sm:$0xff]
    %v2020 = vld [vmem:[#allocation4 + $0x40] sm:$0xff]
    %v2021 = vld [vmem:[#allocation4 + $0x48] sm:$0xff]
    %v2022 = vld [vmem:[#allocation4 + $0x50] sm:$0xff]
    %v2023 = vld [vmem:[#allocation4 + $0x58] sm:$0xff]
    %v2024 = vld [vmem:[#allocation4 + $0x60] sm:$0xff]
    %v2025 = vld [vmem:[#allocation4 + $0x68] sm:$0xff]
    %v2026 = vld [vmem:[#allocation4 + $0x70] sm:$0xff]
    %v2027 = vld [vmem:[#allocation4 + $0x78] sm:$0xff]
    %v2028 = vld [vmem:[#allocation4 + $0x80] sm:$0xff]
    %v2029 = vld [vmem:[#allocation4 + $0x88] sm:$0xff]
    %v2030 = vld [vmem:[#allocation4 + $0x90] sm:$0xff]
    %v2031 = vld [vmem:[#allocation4 + $0x98] sm:$0xff]
    %v2032 = vld [vmem:[#allocation4 + $0xa0] sm:$0xff]
    %v2033 = vld [vmem:[#allocation4 + $0xa8] sm:$0xff]
    %v2034 = vld [vmem:[#allocation4 + $0xb0] sm:$0xff]
    %v2035 = vld [vmem:[#allocation4 + $0xb8] sm:$0xff]
    %v2036 = vld [vmem:[#allocation4 + $0xc0] sm:$0xff]
    %v2037 = vld [vmem:[#allocation4 + $0xc8] sm:$0xff]
    %v2038 = vld [vmem:[#allocation4 + $0xd0] sm:$0xff]
    %v2039 = vld [vmem:[#allocation4 + $0xd8] sm:$0xff]
    %v2040 = vld [vmem:[#allocation4 + $0xe0] sm:$0xff]
    %v2041 = vld [vmem:[#allocation4 + $0xe8] sm:$0xff]
    %v2042 = vld [vmem:[#allocation4 + $0xf0] sm:$0xff]
    %v2043 = vld [vmem:[#allocation4 + $0xf8] sm:$0xff]
    %v2044 = vld [vmem:[#allocation4 + $0x100] sm:$0xff]
    %v2045 = vld [vmem:[#allocation4 + $0x108] sm:$0xff]
    %v2046 = vld [vmem:[#allocation4 + $0x110] sm:$0xff]
    %v2047 = vld [vmem:[#allocation4 + $0x118] sm:$0xff]
    %v2048 = vld [vmem:[#allocation4 + $0x120] sm:$0xff]
    %v2049 = vld [vmem:[#allocation4 + $0x128] sm:$0xff]
    %v2050 = vld [vmem:[#allocation4 + $0x130] sm:$0xff]
    %v2051 = vld [vmem:[#allocation4 + $0x138] sm:$0xff]
    %v2052 = vld [vmem:[#allocation4 + $0x140] sm:$0xff]
    %v2053 = vld [vmem:[#allocation4 + $0x148] sm:$0xff]
    %v2054 = vld [vmem:[#allocation4 + $0x150] sm:$0xff]
    %v2055 = vld [vmem:[#allocation4 + $0x158] sm:$0xff]
    %v2056 = vld [vmem:[#allocation4 + $0x160] sm:$0xff]
    %v2057 = vld [vmem:[#allocation4 + $0x168] sm:$0xff]
    %v2058 = vld [vmem:[#allocation4 + $0x170] sm:$0xff]
    %v2059 = vld [vmem:[#allocation4 + $0x178] sm:$0xff]
    %v2060 = vld [vmem:[#allocation4 + $0x180] sm:$0xff]
    %v2061 = vld [vmem:[#allocation4 + $0x188] sm:$0xff]
    %v2062 = vld [vmem:[#allocation4 + $0x190] sm:$0xff]
    %v2063 = vld [vmem:[#allocation4 + $0x198] sm:$0xff]
    %v2064 = vld [vmem:[#allocation4 + $0x1a0] sm:$0xff]
    %v2065 = vld [vmem:[#allocation4 + $0x1a8] sm:$0xff]
    %v2066 = vld [vmem:[#allocation4 + $0x1b0] sm:$0xff]
    %v2067 = vld [vmem:[#allocation4 + $0x1b8] sm:$0xff]
    %v2068 = vld [vmem:[#allocation4 + $0x1c0] sm:$0xff]
    %v2069 = vld [vmem:[#allocation4 + $0x1c8] sm:$0xff]
    %v2070 = vld [vmem:[#allocation4 + $0x1d0] sm:$0xff]
    %v2071 = vld [vmem:[#allocation4 + $0x1d8] sm:$0xff]
    %v2072 = vld [vmem:[#allocation4 + $0x1e0] sm:$0xff]
    %v2073 = vld [vmem:[#allocation4 + $0x1e8] sm:$0xff]
    %v2074 = vld [vmem:[#allocation4 + $0x1f0] sm:$0xff]
    %v2075 = vld [vmem:[#allocation4 + $0x1f8] sm:$0xff]
    %v2076 = vld [vmem:[%s9 + $0x4] sm:$0x3]
    %v2078 = vlaneseq
    %v2079 = vshrl.u32 %v2078, 7
    %v2080 = vsub.s32 0, %v2079
    %v2081 = vrot.slane %v2076, %v2080
    %v2082 = vlaneseq
    %v2083 = vshrl.u32 %v2082, 7
    %v2084 = vsub.s32 1, %v2083
    %v2085 = vrot.slane %v2076, %v2084
    %v2152 = vunpack.c.l.b16 %v2012
    %v2153 = vunpack.c.h.b16 %v2012
    %v2154 = vunpack.c.l.b16 %v2013
    %v2155 = vunpack.c.h.b16 %v2013
    %v2156 = vunpack.c.l.b16 %v2014
    %v2157 = vunpack.c.h.b16 %v2014
    %v2158 = vunpack.c.l.b16 %v2015
    %v2159 = vunpack.c.h.b16 %v2015
    %v2160 = vunpack.c.l.b16 %v2016
    %v2161 = vunpack.c.h.b16 %v2016
    %v2162 = vunpack.c.l.b16 %v2017
    %v2163 = vunpack.c.h.b16 %v2017
    %v2164 = vunpack.c.l.b16 %v2018
    %v2165 = vunpack.c.h.b16 %v2018
    %v2166 = vunpack.c.l.b16 %v2019
    %v2167 = vunpack.c.h.b16 %v2019
    %v2168 = vunpack.c.l.b16 %v2020
    %v2169 = vunpack.c.h.b16 %v2020
    %v2170 = vunpack.c.l.b16 %v2021
    %v2171 = vunpack.c.h.b16 %v2021
    %v2172 = vunpack.c.l.b16 %v2022
    %v2173 = vunpack.c.h.b16 %v2022
    %v2174 = vunpack.c.l.b16 %v2023
    %v2175 = vunpack.c.h.b16 %v2023
    %v2176 = vunpack.c.l.b16 %v2024
    %v2177 = vunpack.c.h.b16 %v2024
    %v2178 = vunpack.c.l.b16 %v2025
    %v2179 = vunpack.c.h.b16 %v2025
    %v2180 = vunpack.c.l.b16 %v2026
    %v2181 = vunpack.c.h.b16 %v2026
    %v2182 = vunpack.c.l.b16 %v2027
    %v2183 = vunpack.c.h.b16 %v2027
    %v2184 = vunpack.c.l.b16 %v2028
    %v2185 = vunpack.c.h.b16 %v2028
    %v2186 = vunpack.c.l.b16 %v2029
    %v2187 = vunpack.c.h.b16 %v2029
    %v2188 = vunpack.c.l.b16 %v2030
    %v2189 = vunpack.c.h.b16 %v2030
    %v2190 = vunpack.c.l.b16 %v2031
    %v2191 = vunpack.c.h.b16 %v2031
    %v2192 = vunpack.c.l.b16 %v2032
    %v2193 = vunpack.c.h.b16 %v2032
    %v2194 = vunpack.c.l.b16 %v2033
    %v2195 = vunpack.c.h.b16 %v2033
    %v2196 = vunpack.c.l.b16 %v2034
    %v2197 = vunpack.c.h.b16 %v2034
    %v2198 = vunpack.c.l.b16 %v2035
    %v2199 = vunpack.c.h.b16 %v2035
    %v2200 = vunpack.c.l.b16 %v2036
    %v2201 = vunpack.c.h.b16 %v2036
    %v2202 = vunpack.c.l.b16 %v2037
    %v2203 = vunpack.c.h.b16 %v2037
    %v2204 = vunpack.c.l.b16 %v2038
    %v2205 = vunpack.c.h.b16 %v2038
    %v2206 = vunpack.c.l.b16 %v2039
    %v2207 = vunpack.c.h.b16 %v2039
    %v2208 = vunpack.c.l.b16 %v2040
    %v2209 = vunpack.c.h.b16 %v2040
    %v2210 = vunpack.c.l.b16 %v2041
    %v2211 = vunpack.c.h.b16 %v2041
    %v2212 = vunpack.c.l.b16 %v2042
    %v2213 = vunpack.c.h.b16 %v2042
    %v2214 = vunpack.c.l.b16 %v2043
    %v2215 = vunpack.c.h.b16 %v2043
    %v2216 = vunpack.c.l.b16 %v2044
    %v2217 = vunpack.c.h.b16 %v2044
    %v2218 = vunpack.c.l.b16 %v2045
    %v2219 = vunpack.c.h.b16 %v2045
    %v2220 = vunpack.c.l.b16 %v2046
    %v2221 = vunpack.c.h.b16 %v2046
    %v2222 = vunpack.c.l.b16 %v2047
    %v2223 = vunpack.c.h.b16 %v2047
    %v2224 = vunpack.c.l.b16 %v2048
    %v2225 = vunpack.c.h.b16 %v2048
    %v2226 = vunpack.c.l.b16 %v2049
    %v2227 = vunpack.c.h.b16 %v2049
    %v2228 = vunpack.c.l.b16 %v2050
    %v2229 = vunpack.c.h.b16 %v2050
    %v2230 = vunpack.c.l.b16 %v2051
    %v2231 = vunpack.c.h.b16 %v2051
    %v2232 = vunpack.c.l.b16 %v2052
    %v2233 = vunpack.c.h.b16 %v2052
    %v2234 = vunpack.c.l.b16 %v2053
    %v2235 = vunpack.c.h.b16 %v2053
    %v2236 = vunpack.c.l.b16 %v2054
    %v2237 = vunpack.c.h.b16 %v2054
    %v2238 = vunpack.c.l.b16 %v2055
    %v2239 = vunpack.c.h.b16 %v2055
    %v2240 = vunpack.c.l.b16 %v2056
    %v2241 = vunpack.c.h.b16 %v2056
    %v2242 = vunpack.c.l.b16 %v2057
    %v2243 = vunpack.c.h.b16 %v2057
    %v2244 = vunpack.c.l.b16 %v2058
    %v2245 = vunpack.c.h.b16 %v2058
    %v2246 = vunpack.c.l.b16 %v2059
    %v2247 = vunpack.c.h.b16 %v2059
    %v2248 = vunpack.c.l.b16 %v2060
    %v2249 = vunpack.c.h.b16 %v2060
    %v2250 = vunpack.c.l.b16 %v2061
    %v2251 = vunpack.c.h.b16 %v2061
    %v2252 = vunpack.c.l.b16 %v2062
    %v2253 = vunpack.c.h.b16 %v2062
    %v2254 = vunpack.c.l.b16 %v2063
    %v2255 = vunpack.c.h.b16 %v2063
    %v2256 = vunpack.c.l.b16 %v2064
    %v2257 = vunpack.c.h.b16 %v2064
    %v2258 = vunpack.c.l.b16 %v2065
    %v2259 = vunpack.c.h.b16 %v2065
    %v2260 = vunpack.c.l.b16 %v2066
    %v2261 = vunpack.c.h.b16 %v2066
    %v2262 = vunpack.c.l.b16 %v2067
    %v2263 = vunpack.c.h.b16 %v2067
    %v2264 = vunpack.c.l.b16 %v2068
    %v2265 = vunpack.c.h.b16 %v2068
    %v2266 = vunpack.c.l.b16 %v2069
    %v2267 = vunpack.c.h.b16 %v2069
    %v2268 = vunpack.c.l.b16 %v2070
    %v2269 = vunpack.c.h.b16 %v2070
    %v2270 = vunpack.c.l.b16 %v2071
    %v2271 = vunpack.c.h.b16 %v2071
    %v2272 = vunpack.c.l.b16 %v2072
    %v2273 = vunpack.c.h.b16 %v2072
    %v2274 = vunpack.c.l.b16 %v2073
    %v2275 = vunpack.c.h.b16 %v2073
    %v2276 = vunpack.c.l.b16 %v2074
    %v2277 = vunpack.c.h.b16 %v2074
    %v2278 = vunpack.c.l.b16 %v2075
    %v2279 = vunpack.c.h.b16 %v2075
    %v2280 = vpack.c.b16 %v2154, %v2152
    %v2281 = vpack.c.b16 %v2155, %v2153
    %v2282 = vpack.c.b16 %v2158, %v2156
    %v2283 = vpack.c.b16 %v2159, %v2157
    %v2284 = vpack.c.b16 %v2162, %v2160
    %v2285 = vpack.c.b16 %v2163, %v2161
    %v2286 = vpack.c.b16 %v2166, %v2164
    %v2287 = vpack.c.b16 %v2167, %v2165
    %v2288 = vpack.c.b16 %v2170, %v2168
    %v2289 = vpack.c.b16 %v2171, %v2169
    %v2290 = vpack.c.b16 %v2174, %v2172
    %v2291 = vpack.c.b16 %v2175, %v2173
    %v2292 = vpack.c.b16 %v2178, %v2176
    %v2293 = vpack.c.b16 %v2179, %v2177
    %v2294 = vpack.c.b16 %v2182, %v2180
    %v2295 = vpack.c.b16 %v2183, %v2181
    %v2296 = vpack.c.b16 %v2186, %v2184
    %v2297 = vpack.c.b16 %v2187, %v2185
    %v2298 = vpack.c.b16 %v2190, %v2188
    %v2299 = vpack.c.b16 %v2191, %v2189
    %v2300 = vpack.c.b16 %v2194, %v2192
    %v2301 = vpack.c.b16 %v2195, %v2193
    %v2302 = vpack.c.b16 %v2198, %v2196
    %v2303 = vpack.c.b16 %v2199, %v2197
    %v2304 = vpack.c.b16 %v2202, %v2200
    %v2305 = vpack.c.b16 %v2203, %v2201
    %v2306 = vpack.c.b16 %v2206, %v2204
    %v2307 = vpack.c.b16 %v2207, %v2205
    %v2308 = vpack.c.b16 %v2210, %v2208
    %v2309 = vpack.c.b16 %v2211, %v2209
    %v2310 = vpack.c.b16 %v2214, %v2212
    %v2311 = vpack.c.b16 %v2215, %v2213
    %v2312 = vpack.c.b16 %v2218, %v2216
    %v2313 = vpack.c.b16 %v2219, %v2217
    %v2314 = vpack.c.b16 %v2222, %v2220
    %v2315 = vpack.c.b16 %v2223, %v2221
    %v2316 = vpack.c.b16 %v2226, %v2224
    %v2317 = vpack.c.b16 %v2227, %v2225
    %v2318 = vpack.c.b16 %v2230, %v2228
    %v2319 = vpack.c.b16 %v2231, %v2229
    %v2320 = vpack.c.b16 %v2234, %v2232
    %v2321 = vpack.c.b16 %v2235, %v2233
    %v2322 = vpack.c.b16 %v2238, %v2236
    %v2323 = vpack.c.b16 %v2239, %v2237
    %v2324 = vpack.c.b16 %v2242, %v2240
    %v2325 = vpack.c.b16 %v2243, %v2241
    %v2326 = vpack.c.b16 %v2246, %v2244
    %v2327 = vpack.c.b16 %v2247, %v2245
    %v2328 = vpack.c.b16 %v2250, %v2248
    %v2329 = vpack.c.b16 %v2251, %v2249
    %v2330 = vpack.c.b16 %v2254, %v2252
    %v2331 = vpack.c.b16 %v2255, %v2253
    %v2332 = vpack.c.b16 %v2258, %v2256
    %v2333 = vpack.c.b16 %v2259, %v2257
    %v2334 = vpack.c.b16 %v2262, %v2260
    %v2335 = vpack.c.b16 %v2263, %v2261
    %v2336 = vpack.c.b16 %v2266, %v2264
    %v2337 = vpack.c.b16 %v2267, %v2265
    %v2338 = vpack.c.b16 %v2270, %v2268
    %v2339 = vpack.c.b16 %v2271, %v2269
    %v2340 = vpack.c.b16 %v2274, %v2272
    %v2341 = vpack.c.b16 %v2275, %v2273
    %v2342 = vpack.c.b16 %v2278, %v2276
    %v2343 = vpack.c.b16 %v2279, %v2277
    %2408 = vmatprep.subr.bf16.mxu0 %v2295
    %2409 = vmatpush1.bf16.msra.mxu0 %v2294
    %2410 = vmatprep.subr.bf16.mxu0 %v2293
    %2411 = vmatpush1.bf16.msra.mxu0 %v2292
    %2412 = vmatprep.subr.bf16.mxu0 %v2291
    %2413 = vmatpush1.bf16.msra.mxu0 %v2290
    %2414 = vmatprep.subr.bf16.mxu0 %v2289
    %2415 = vmatpush1.bf16.msra.mxu0 %v2288
    %2416 = vmatprep.subr.bf16.mxu0 %v2287
    %2417 = vmatpush1.bf16.msra.mxu0 %v2286
    %2418 = vmatprep.subr.bf16.mxu0 %v2285
    %2419 = vmatpush1.bf16.msra.mxu0 %v2284
    %2420 = vmatprep.subr.bf16.mxu0 %v2283
    %2421 = vmatpush1.bf16.msra.mxu0 %v2282
    %2422 = vmatprep.subr.bf16.mxu0 %v2281
    %2423 = vmatpush1.bf16.msra.mxu0 %v2280
    %2424 = vmatprep.subr.bf16.mxu0 %v2311
    %2425 = vmatpush2.bf16.msra.mxu0 %v2310
    %2426 = vmatprep.subr.bf16.mxu0 %v2309
    %2427 = vmatpush2.bf16.msra.mxu0 %v2308
    %2428 = vmatprep.subr.bf16.mxu0 %v2307
    %2429 = vmatpush2.bf16.msra.mxu0 %v2306
    %2430 = vmatprep.subr.bf16.mxu0 %v2305
    %2431 = vmatpush2.bf16.msra.mxu0 %v2304
    %2432 = vmatprep.subr.bf16.mxu0 %v2303
    %2433 = vmatpush2.bf16.msra.mxu0 %v2302
    %2434 = vmatprep.subr.bf16.mxu0 %v2301
    %2435 = vmatpush2.bf16.msra.mxu0 %v2300
    %2436 = vmatprep.subr.bf16.mxu0 %v2299
    %2437 = vmatpush2.bf16.msra.mxu0 %v2298
    %2438 = vmatprep.subr.bf16.mxu0 %v2297
    %2439 = vmatpush2.bf16.msra.mxu0 %v2296
    %2440 = vmatprep.mubr.bf16.mxu0 %v2009
    %2441 = vmatmul.mubr.bf16.gmra.mxu0 %v2008
    %v2442 = vpop.f32.mrf.mxu0
    %v2443 = vadd.f32 %v2081, %v2442
    %v2444 = vpop.f32.mrf.mxu0
    %v2445 = vadd.f32 %v2085, %v2444
    %v2446 = vpop.f32.mrf.mxu0
    %v2447 = vpop.f32.mrf.mxu0
    %2448 = vdwg.mxu0
    %2449 = vmatprep.subr.bf16.mxu0 %v2327
    %2450 = vmatpush1.bf16.msra.mxu0 %v2326
    %2451 = vmatprep.subr.bf16.mxu0 %v2325
    %2452 = vmatpush1.bf16.msra.mxu0 %v2324
    %2453 = vmatprep.subr.bf16.mxu0 %v2323
    %2454 = vmatpush1.bf16.msra.mxu0 %v2322
    %2455 = vmatprep.subr.bf16.mxu0 %v2321
    %2456 = vmatpush1.bf16.msra.mxu0 %v2320
    %2457 = vmatprep.subr.bf16.mxu0 %v2319
    %2458 = vmatpush1.bf16.msra.mxu0 %v2318
    %2459 = vmatprep.subr.bf16.mxu0 %v2317
    %2460 = vmatpush1.bf16.msra.mxu0 %v2316
    %2461 = vmatprep.subr.bf16.mxu0 %v2315
    %2462 = vmatpush1.bf16.msra.mxu0 %v2314
    %2463 = vmatprep.subr.bf16.mxu0 %v2313
    %2464 = vmatpush1.bf16.msra.mxu0 %v2312
    %2465 = vmatprep.subr.bf16.mxu0 %v2343
    %2466 = vmatpush2.bf16.msra.mxu0 %v2342
    %2467 = vmatprep.subr.bf16.mxu0 %v2341
    %2468 = vmatpush2.bf16.msra.mxu0 %v2340
    %2469 = vmatprep.subr.bf16.mxu0 %v2339
    %2470 = vmatpush2.bf16.msra.mxu0 %v2338
    %2471 = vmatprep.subr.bf16.mxu0 %v2337
    %2472 = vmatpush2.bf16.msra.mxu0 %v2336
    %2473 = vmatprep.subr.bf16.mxu0 %v2335
    %2474 = vmatpush2.bf16.msra.mxu0 %v2334
    %2475 = vmatprep.subr.bf16.mxu0 %v2333
    %2476 = vmatpush2.bf16.msra.mxu0 %v2332
    %2477 = vmatprep.subr.bf16.mxu0 %v2331
    %2478 = vmatpush2.bf16.msra.mxu0 %v2330
    %2479 = vmatprep.subr.bf16.mxu0 %v2329
    %2480 = vmatpush2.bf16.msra.mxu0 %v2328
    %2481 = vmatprep.mubr.bf16.mxu0 %v2011
    %2482 = vmatmul.mubr.bf16.gmra.mxu0 %v2010
    %v2483 = vpop.f32.mrf.mxu0
    %v2484 = vadd.f32 %v2443, %v2483
    %v2485 = vpop.f32.mrf.mxu0
    %v2486 = vadd.f32 %v2445, %v2485
    %v2487 = vpop.f32.mrf.mxu0
    %v2488 = vpop.f32.mrf.mxu0
    %2489 = vdwg.mxu0
    %v2490 = vmax.f32 %v2484, 0.0
    %v2491 = vmax.f32 %v2486, 0.0
    %v2492 = vpack.c.bf16 %v2490, %v2490
    %v2493 = vpack.c.bf16 %v2491, %v2491
    %v2494 = vld [vmem:[%s4] sm:$0xf]
    %v2495 = vld [vmem:[%s4 + $0x4] sm:$0xf]
    %v2496 = vld [vmem:[%s4 + $0x8] sm:$0xf]
    %v2497 = vld [vmem:[%s4 + $0xc] sm:$0xf]
    %v2498 = vld [vmem:[%s4 + $0x10] sm:$0xf]
    %v2499 = vld [vmem:[%s4 + $0x14] sm:$0xf]
    %v2500 = vld [vmem:[%s4 + $0x18] sm:$0xf]
    %v2501 = vld [vmem:[%s4 + $0x1c] sm:$0xf]
    %v2502 = vld [vmem:[%s4 + $0x20] sm:$0xf]
    %v2503 = vld [vmem:[%s4 + $0x24] sm:$0xf]
    %v2504 = vld [vmem:[%s4 + $0x28] sm:$0xf]
    %v2505 = vld [vmem:[%s4 + $0x2c] sm:$0xf]
    %v2506 = vld [vmem:[%s4 + $0x30] sm:$0xf]
    %v2507 = vld [vmem:[%s4 + $0x34] sm:$0xf]
    %v2508 = vld [vmem:[%s4 + $0x38] sm:$0xf]
    %v2509 = vld [vmem:[%s4 + $0x3c] sm:$0xf]
    %v2510 = vld [vmem:[%s4 + $0x40] sm:$0xf]
    %v2511 = vld [vmem:[%s4 + $0x44] sm:$0xf]
    %v2512 = vld [vmem:[%s4 + $0x48] sm:$0xf]
    %v2513 = vld [vmem:[%s4 + $0x4c] sm:$0xf]
    %v2514 = vld [vmem:[%s4 + $0x50] sm:$0xf]
    %v2515 = vld [vmem:[%s4 + $0x54] sm:$0xf]
    %v2516 = vld [vmem:[%s4 + $0x58] sm:$0xf]
    %v2517 = vld [vmem:[%s4 + $0x5c] sm:$0xf]
    %v2518 = vld [vmem:[%s4 + $0x60] sm:$0xf]
    %v2519 = vld [vmem:[%s4 + $0x64] sm:$0xf]
    %v2520 = vld [vmem:[%s4 + $0x68] sm:$0xf]
    %v2521 = vld [vmem:[%s4 + $0x6c] sm:$0xf]
    %v2522 = vld [vmem:[%s4 + $0x70] sm:$0xf]
    %v2523 = vld [vmem:[%s4 + $0x74] sm:$0xf]
    %v2524 = vld [vmem:[%s4 + $0x78] sm:$0xf]
    %v2525 = vld [vmem:[%s4 + $0x7c] sm:$0xf]
    %v2526 = vld [vmem:[%s9 + $0x6] sm:$0x1]
    %v2528 = vlaneseq
    %v2529 = vshrl.u32 %v2528, 7
    %v2530 = vsub.s32 0, %v2529
    %v2531 = vrot.slane %v2526, %v2530
    %v2565 = vunpack.c.l.b16 %v2494
    %v2566 = vunpack.c.l.b16 %v2495
    %v2567 = vunpack.c.l.b16 %v2496
    %v2568 = vunpack.c.l.b16 %v2497
    %v2569 = vunpack.c.l.b16 %v2498
    %v2570 = vunpack.c.l.b16 %v2499
    %v2571 = vunpack.c.l.b16 %v2500
    %v2572 = vunpack.c.l.b16 %v2501
    %v2573 = vunpack.c.l.b16 %v2502
    %v2574 = vunpack.c.l.b16 %v2503
    %v2575 = vunpack.c.l.b16 %v2504
    %v2576 = vunpack.c.l.b16 %v2505
    %v2577 = vunpack.c.l.b16 %v2506
    %v2578 = vunpack.c.l.b16 %v2507
    %v2579 = vunpack.c.l.b16 %v2508
    %v2580 = vunpack.c.l.b16 %v2509
    %v2581 = vunpack.c.l.b16 %v2510
    %v2582 = vunpack.c.l.b16 %v2511
    %v2583 = vunpack.c.l.b16 %v2512
    %v2584 = vunpack.c.l.b16 %v2513
    %v2585 = vunpack.c.l.b16 %v2514
    %v2586 = vunpack.c.l.b16 %v2515
    %v2587 = vunpack.c.l.b16 %v2516
    %v2588 = vunpack.c.l.b16 %v2517
    %v2589 = vunpack.c.l.b16 %v2518
    %v2590 = vunpack.c.l.b16 %v2519
    %v2591 = vunpack.c.l.b16 %v2520
    %v2592 = vunpack.c.l.b16 %v2521
    %v2593 = vunpack.c.l.b16 %v2522
    %v2594 = vunpack.c.l.b16 %v2523
    %v2595 = vunpack.c.l.b16 %v2524
    %v2596 = vunpack.c.l.b16 %v2525
    %v2597 = vpack.c.b16 %v2566, %v2565
    %v2598 = vpack.c.b16 %v2568, %v2567
    %v2599 = vpack.c.b16 %v2570, %v2569
    %v2600 = vpack.c.b16 %v2572, %v2571
    %v2601 = vpack.c.b16 %v2574, %v2573
    %v2602 = vpack.c.b16 %v2576, %v2575
    %v2603 = vpack.c.b16 %v2578, %v2577
    %v2604 = vpack.c.b16 %v2580, %v2579
    %v2605 = vpack.c.b16 %v2582, %v2581
    %v2606 = vpack.c.b16 %v2584, %v2583
    %v2607 = vpack.c.b16 %v2586, %v2585
    %v2608 = vpack.c.b16 %v2588, %v2587
    %v2609 = vpack.c.b16 %v2590, %v2589
    %v2610 = vpack.c.b16 %v2592, %v2591
    %v2611 = vpack.c.b16 %v2594, %v2593
    %v2612 = vpack.c.b16 %v2596, %v2595
    %2629 = vmatprep.subr.bf16.mxu0 0
    %2630 = vmatpush1.bf16.msra.mxu0 %v2604
    %2631 = vmatprep.subr.bf16.mxu0 0
    %2632 = vmatpush1.bf16.msra.mxu0 %v2603
    %2633 = vmatprep.subr.bf16.mxu0 0
    %2634 = vmatpush1.bf16.msra.mxu0 %v2602
    %2635 = vmatprep.subr.bf16.mxu0 0
    %2636 = vmatpush1.bf16.msra.mxu0 %v2601
    %2637 = vmatprep.subr.bf16.mxu0 0
    %2638 = vmatpush1.bf16.msra.mxu0 %v2600
    %2639 = vmatprep.subr.bf16.mxu0 0
    %2640 = vmatpush1.bf16.msra.mxu0 %v2599
    %2641 = vmatprep.subr.bf16.mxu0 0
    %2642 = vmatpush1.bf16.msra.mxu0 %v2598
    %2643 = vmatprep.subr.bf16.mxu0 0
    %2644 = vmatpush1.bf16.msra.mxu0 %v2597
    %2645 = vmatprep.subr.bf16.mxu0 0
    %2646 = vmatpush2.bf16.msra.mxu0 %v2612
    %2647 = vmatprep.subr.bf16.mxu0 0
    %2648 = vmatpush2.bf16.msra.mxu0 %v2611
    %2649 = vmatprep.subr.bf16.mxu0 0
    %2650 = vmatpush2.bf16.msra.mxu0 %v2610
    %2651 = vmatprep.subr.bf16.mxu0 0
    %2652 = vmatpush2.bf16.msra.mxu0 %v2609
    %2653 = vmatprep.subr.bf16.mxu0 0
    %2654 = vmatpush2.bf16.msra.mxu0 %v2608
    %2655 = vmatprep.subr.bf16.mxu0 0
    %2656 = vmatpush2.bf16.msra.mxu0 %v2607
    %2657 = vmatprep.subr.bf16.mxu0 0
    %2658 = vmatpush2.bf16.msra.mxu0 %v2606
    %2659 = vmatprep.subr.bf16.mxu0 0
    %2660 = vmatpush2.bf16.msra.mxu0 %v2605
    %2661 = vmatprep.mubr.bf16.mxu0 %v2493
    %2662 = vmatmul.mubr.bf16.gmra.mxu0 %v2492
    %v2663 = vpop.f32.mrf.mxu0
    %v2664 = vadd.f32 %v2531, %v2663
    %v2665 = vpop.f32.mrf.mxu0
    %v2666 = vpop.f32.mrf.mxu0
    %v2667 = vpop.f32.mrf.mxu0
    %2668 = vdwg.mxu0
    %vm2669 = vcmask 254976
    %v2670 = vsel %vm2669, %v2664, 0.0
    %2671 = vadd.xlane.f32.xlu0 %v2670
    %v2672 = vpop.xlane.xlu0 %2671
    %v2673 = vrcp.pop 32.0
    %v2674 = vmul.f32 %v2672, %v2673
    %v2675 = vsub.f32 %v2664, %v2674
    %v2676 = vmul.f32 %v2675, %v2675
    %v2677 = vsel %vm2669, %v2676, 0.0
    %2678 = vadd.xlane.f32.xlu0 %v2677
    %v2679 = vpop.xlane.xlu0 %2678
    %v2680 = vmul.f32 %v2679, %v2673
    %v2681 = vadd.f32 %v2680, 1e-05
    %v2682 = vrsqrt.pop %v2681
    %v2683 = vmul.f32 %v2675, %v2682
    %v2684 = vld [vmem:[%s9 + $0x7] sm:$0x1]
    %v2686 = vlaneseq
    %v2687 = vshrl.u32 %v2686, 7
    %v2688 = vsub.s32 0, %v2687
    %v2689 = vrot.slane %v2684, %v2688
    %v2691 = vmul.f32 %v2683, %v2689
    %v2692 = vld [vmem:[%s9 + $0x8] sm:$0x1]
    %v2694 = vlaneseq
    %v2695 = vshrl.u32 %v2694, 7
    %v2696 = vsub.s32 0, %v2695
    %v2697 = vrot.slane %v2692, %v2696
    %v2699 = vadd.f32 %v2691, %v2697
    %v2700 = vtanh.pop %v2699
    %v2701 = vpack.c.bf16 %v2700, %v2700
    %v2702 = vld [vmem:[%s5] sm:$0xf]
    %v2703 = vld [vmem:[%s5 + $0x4] sm:$0xf]
    %v2704 = vld [vmem:[%s5 + $0x8] sm:$0xf]
    %v2705 = vld [vmem:[%s5 + $0xc] sm:$0xf]
    %v2706 = vld [vmem:[%s1] sm:$0x3]
    %v2707 = vpack.c.bf16 %v2706, %v2706
    %v2708 = vld [vmem:[%s6] sm:$0x3]
    %vm2709 = vcmask 31744
    %v2711 = vsel %vm2709, %v2707, 0
    %vm2713 = vcmask 1041408
    %v2715 = vsel %vm2713, %v2708, 0
    %2717 = vmatprep.subr.bf16.mxu0 0
    %2718 = vmatpush1.bf16.msra.mxu0 0
    %2719 = vmatprep.subr.bf16.mxu0 0
    %2720 = vmatpush1.bf16.msra.mxu0 0
    %2721 = vmatprep.subr.bf16.mxu0 0
    %2722 = vmatpush1.bf16.msra.mxu0 0
    %2723 = vmatprep.subr.bf16.mxu0 0
    %2724 = vmatpush1.bf16.msra.mxu0 0
    %2725 = vmatprep.subr.bf16.mxu0 0
    %2726 = vmatpush1.bf16.msra.mxu0 0
    %2727 = vmatprep.subr.bf16.mxu0 0
    %2728 = vmatpush1.bf16.msra.mxu0 0
    %2729 = vmatprep.subr.bf16.mxu0 0
    %2730 = vmatpush1.bf16.msra.mxu0 0
    %2731 = vmatprep.subr.bf16.mxu0 0
    %2732 = vmatpush1.bf16.msra.mxu0 %v2715
    %2733 = vmatprep.subr.bf16.mxu0 0
    %2734 = vmatpush2.bf16.msra.mxu0 0
    %2735 = vmatprep.subr.bf16.mxu0 0
    %2736 = vmatpush2.bf16.msra.mxu0 0
    %2737 = vmatprep.subr.bf16.mxu0 0
    %2738 = vmatpush2.bf16.msra.mxu0 0
    %2739 = vmatprep.subr.bf16.mxu0 0
    %2740 = vmatpush2.bf16.msra.mxu0 0
    %2741 = vmatprep.subr.bf16.mxu0 0
    %2742 = vmatpush2.bf16.msra.mxu0 0
    %2743 = vmatprep.subr.bf16.mxu0 0
    %2744 = vmatpush2.bf16.msra.mxu0 0
    %2745 = vmatprep.subr.bf16.mxu0 0
    %2746 = vmatpush2.bf16.msra.mxu0 0
    %2747 = vmatprep.subr.bf16.mxu0 0
    %2748 = vmatpush2.bf16.msra.mxu0 0
    %2749 = vmatprep.mubr.bf16.mxu0 0
    %2750 = vmatmul.mubr.bf16.gmra.mxu0 %v2711
    %v2751 = vpop.f32.mrf.mxu0
    %v2752 = vadd.f32 0.0, %v2751
    %v2753 = vpop.f32.mrf.mxu0
    %v2754 = vpop.f32.mrf.mxu0
    %v2755 = vpop.f32.mrf.mxu0
    %2756 = vdwg.mxu0
    %v2761 = vunpack.c.l.b16 %v2702
    %v2762 = vunpack.c.l.b16 %v2703
    %v2763 = vunpack.c.l.b16 %v2704
    %v2764 = vunpack.c.l.b16 %v2705
    %v2765 = vpack.c.b16 %v2762, %v2761
    %v2766 = vpack.c.b16 %v2764, %v2763
    %vm2769 = vcmask 261120
    %v2771 = vsel %vm2769, %v2701, 0
    %2773 = vmatprep.subr.bf16.mxu0 0
    %2774 = vmatpush1.bf16.msra.mxu0 0
    %2775 = vmatprep.subr.bf16.mxu0 0
    %2776 = vmatpush1.bf16.msra.mxu0 0
    %2777 = vmatprep.subr.bf16.mxu0 0
    %2778 = vmatpush1.bf16.msra.mxu0 0
    %2779 = vmatprep.subr.bf16.mxu0 0
    %2780 = vmatpush1.bf16.msra.mxu0 0
    %2781 = vmatprep.subr.bf16.mxu0 0
    %2782 = vmatpush1.bf16.msra.mxu0 0
    %2783 = vmatprep.subr.bf16.mxu0 0
    %2784 = vmatpush1.bf16.msra.mxu0 0
    %2785 = vmatprep.subr.bf16.mxu0 0
    %2786 = vmatpush1.bf16.msra.mxu0 %v2766
    %2787 = vmatprep.subr.bf16.mxu0 0
    %2788 = vmatpush1.bf16.msra.mxu0 %v2765
    %2789 = vmatprep.subr.bf16.mxu0 0
    %2790 = vmatpush2.bf16.msra.mxu0 0
    %2791 = vmatprep.subr.bf16.mxu0 0
    %2792 = vmatpush2.bf16.msra.mxu0 0
    %2793 = vmatprep.subr.bf16.mxu0 0
    %2794 = vmatpush2.bf16.msra.mxu0 0
    %2795 = vmatprep.subr.bf16.mxu0 0
    %2796 = vmatpush2.bf16.msra.mxu0 0
    %2797 = vmatprep.subr.bf16.mxu0 0
    %2798 = vmatpush2.bf16.msra.mxu0 0
    %2799 = vmatprep.subr.bf16.mxu0 0
    %2800 = vmatpush2.bf16.msra.mxu0 0
    %2801 = vmatprep.subr.bf16.mxu0 0
    %2802 = vmatpush2.bf16.msra.mxu0 0
    %2803 = vmatprep.subr.bf16.mxu0 0
    %2804 = vmatpush2.bf16.msra.mxu0 0
    %2805 = vmatprep.mubr.bf16.mxu0 0
    %2806 = vmatmul.mubr.bf16.gmra.mxu0 %v2771
    %v2807 = vpop.f32.mrf.mxu0
    %v2808 = vadd.f32 %v2752, %v2807
    %v2809 = vpop.f32.mrf.mxu0
    %v2810 = vpop.f32.mrf.mxu0
    %v2811 = vpop.f32.mrf.mxu0
    %2812 = vdwg.mxu0
    %v2813 = vld [vmem:[%s9 + $0x9] sm:$0x1]
    %v2815 = vlaneseq
    %v2816 = vshrl.u32 %v2815, 7
    %v2817 = vsub.s32 0, %v2816
    %v2818 = vrot.slane %v2813, %v2817
    %v2820 = vadd.f32 %v2808, %v2818
    %v2821 = vmax.f32 %v2820, 0.0
    %v2822 = vpack.c.bf16 %v2821, %v2821
    %v2823 = vld [vmem:[%s7] sm:$0xf]
    %v2824 = vld [vmem:[%s7 + $0x4] sm:$0xf]
    %v2825 = vld [vmem:[%s7 + $0x8] sm:$0xf]
    %v2826 = vld [vmem:[%s7 + $0xc] sm:$0xf]
    %v2827 = vld [vmem:[%s7 + $0x10] sm:$0xf]
    %v2828 = vld [vmem:[%s7 + $0x14] sm:$0xf]
    %v2829 = vld [vmem:[%s7 + $0x18] sm:$0xf]
    %v2830 = vld [vmem:[%s7 + $0x1c] sm:$0xf]
    %v2831 = vld [vmem:[%s9 + $0xa] sm:$0x1]
    %v2833 = vlaneseq
    %v2834 = vshrl.u32 %v2833, 7
    %v2835 = vsub.s32 0, %v2834
    %v2836 = vrot.slane %v2831, %v2835
    %v2846 = vunpack.c.l.b16 %v2823
    %v2847 = vunpack.c.l.b16 %v2824
    %v2848 = vunpack.c.l.b16 %v2825
    %v2849 = vunpack.c.l.b16 %v2826
    %v2850 = vunpack.c.l.b16 %v2827
    %v2851 = vunpack.c.l.b16 %v2828
    %v2852 = vunpack.c.l.b16 %v2829
    %v2853 = vunpack.c.l.b16 %v2830
    %v2854 = vpack.c.b16 %v2847, %v2846
    %v2855 = vpack.c.b16 %v2849, %v2848
    %v2856 = vpack.c.b16 %v2851, %v2850
    %v2857 = vpack.c.b16 %v2853, %v2852
    %vm2862 = vcmask 523264
    %v2864 = vsel %vm2862, %v2822, 0
    %2866 = vmatprep.subr.bf16.mxu0 0
    %2867 = vmatpush1.bf16.msra.mxu0 0
    %2868 = vmatprep.subr.bf16.mxu0 0
    %2869 = vmatpush1.bf16.msra.mxu0 0
    %2870 = vmatprep.subr.bf16.mxu0 0
    %2871 = vmatpush1.bf16.msra.mxu0 0
    %2872 = vmatprep.subr.bf16.mxu0 0
    %2873 = vmatpush1.bf16.msra.mxu0 0
    %2874 = vmatprep.subr.bf16.mxu0 0
    %2875 = vmatpush1.bf16.msra.mxu0 %v2857
    %2876 = vmatprep.subr.bf16.mxu0 0
    %2877 = vmatpush1.bf16.msra.mxu0 %v2856
    %2878 = vmatprep.subr.bf16.mxu0 0
    %2879 = vmatpush1.bf16.msra.mxu0 %v2855
    %2880 = vmatprep.subr.bf16.mxu0 0
    %2881 = vmatpush1.bf16.msra.mxu0 %v2854
    %2882 = vmatprep.subr.bf16.mxu0 0
    %2883 = vmatpush2.bf16.msra.mxu0 0
    %2884 = vmatprep.subr.bf16.mxu0 0
    %2885 = vmatpush2.bf16.msra.mxu0 0
    %2886 = vmatprep.subr.bf16.mxu0 0
    %2887 = vmatpush2.bf16.msra.mxu0 0
    %2888 = vmatprep.subr.bf16.mxu0 0
    %2889 = vmatpush2.bf16.msra.mxu0 0
    %2890 = vmatprep.subr.bf16.mxu0 0
    %2891 = vmatpush2.bf16.msra.mxu0 0
    %2892 = vmatprep.subr.bf16.mxu0 0
    %2893 = vmatpush2.bf16.msra.mxu0 0
    %2894 = vmatprep.subr.bf16.mxu0 0
    %2895 = vmatpush2.bf16.msra.mxu0 0
    %2896 = vmatprep.subr.bf16.mxu0 0
    %2897 = vmatpush2.bf16.msra.mxu0 0
    %2898 = vmatprep.mubr.bf16.mxu0 0
    %2899 = vmatmul.mubr.bf16.gmra.mxu0 %v2864
    %v2900 = vpop.f32.mrf.mxu0
    %v2901 = vadd.f32 %v2836, %v2900
    %v2902 = vpop.f32.mrf.mxu0
    %v2903 = vpop.f32.mrf.mxu0
    %v2904 = vpop.f32.mrf.mxu0
    %2905 = vdwg.mxu0
    %v2906 = vmax.f32 %v2901, 0.0
    %v2907 = vpack.c.bf16 %v2906, %v2906
    %v2908 = vld [vmem:[%s8] sm:$0xf]
    %v2909 = vld [vmem:[%s8 + $0x4] sm:$0xf]
    %v2910 = vld [vmem:[%s8 + $0x8] sm:$0xf]
    %v2911 = vld [vmem:[%s8 + $0xc] sm:$0xf]
    %v2912 = vld [vmem:[%s8 + $0x10] sm:$0xf]
    %v2913 = vld [vmem:[%s8 + $0x14] sm:$0xf]
    %v2914 = vld [vmem:[%s8 + $0x18] sm:$0xf]
    %v2915 = vld [vmem:[%s8 + $0x1c] sm:$0xf]
    %v2916 = vld [vmem:[%s9 + $0xb] sm:$0x1]
    %v2918 = vlaneseq
    %v2919 = vshrl.u32 %v2918, 7
    %v2920 = vsub.s32 0, %v2919
    %v2921 = vrot.slane %v2916, %v2920
    %v2931 = vunpack.c.l.b16 %v2908
    %v2932 = vunpack.c.l.b16 %v2909
    %v2933 = vunpack.c.l.b16 %v2910
    %v2934 = vunpack.c.l.b16 %v2911
    %v2935 = vunpack.c.l.b16 %v2912
    %v2936 = vunpack.c.l.b16 %v2913
    %v2937 = vunpack.c.l.b16 %v2914
    %v2938 = vunpack.c.l.b16 %v2915
    %v2939 = vpack.c.b16 %v2932, %v2931
    %v2940 = vpack.c.b16 %v2934, %v2933
    %v2941 = vpack.c.b16 %v2936, %v2935
    %v2942 = vpack.c.b16 %v2938, %v2937
    %v2948 = vsel %vm2862, %v2907, 0
    %2950 = vmatprep.subr.bf16.mxu0 0
    %2951 = vmatpush1.bf16.msra.mxu0 0
    %2952 = vmatprep.subr.bf16.mxu0 0
    %2953 = vmatpush1.bf16.msra.mxu0 0
    %2954 = vmatprep.subr.bf16.mxu0 0
    %2955 = vmatpush1.bf16.msra.mxu0 0
    %2956 = vmatprep.subr.bf16.mxu0 0
    %2957 = vmatpush1.bf16.msra.mxu0 0
    %2958 = vmatprep.subr.bf16.mxu0 0
    %2959 = vmatpush1.bf16.msra.mxu0 %v2942
    %2960 = vmatprep.subr.bf16.mxu0 0
    %2961 = vmatpush1.bf16.msra.mxu0 %v2941
    %2962 = vmatprep.subr.bf16.mxu0 0
    %2963 = vmatpush1.bf16.msra.mxu0 %v2940
    %2964 = vmatprep.subr.bf16.mxu0 0
    %2965 = vmatpush1.bf16.msra.mxu0 %v2939
    %2966 = vmatprep.subr.bf16.mxu0 0
    %2967 = vmatpush2.bf16.msra.mxu0 0
    %2968 = vmatprep.subr.bf16.mxu0 0
    %2969 = vmatpush2.bf16.msra.mxu0 0
    %2970 = vmatprep.subr.bf16.mxu0 0
    %2971 = vmatpush2.bf16.msra.mxu0 0
    %2972 = vmatprep.subr.bf16.mxu0 0
    %2973 = vmatpush2.bf16.msra.mxu0 0
    %2974 = vmatprep.subr.bf16.mxu0 0
    %2975 = vmatpush2.bf16.msra.mxu0 0
    %2976 = vmatprep.subr.bf16.mxu0 0
    %2977 = vmatpush2.bf16.msra.mxu0 0
    %2978 = vmatprep.subr.bf16.mxu0 0
    %2979 = vmatpush2.bf16.msra.mxu0 0
    %2980 = vmatprep.subr.bf16.mxu0 0
    %2981 = vmatpush2.bf16.msra.mxu0 0
    %2982 = vmatprep.mubr.bf16.mxu0 0
    %2983 = vmatmul.mubr.bf16.gmra.mxu0 %v2948
    %v2984 = vpop.f32.mrf.mxu0
    %v2985 = vadd.f32 %v2921, %v2984
    %v2986 = vpop.f32.mrf.mxu0
    %v2987 = vpop.f32.mrf.mxu0
    %v2988 = vpop.f32.mrf.mxu0
    %2989 = vdwg.mxu0
    %2990 = vst [vmem:[%s10] sm:$0x3] %v2985
    // Predicated region
    $region50: #{critic_forward.1} parent=1 // pred_check
      _
    $region51: #{critic_forward.1} parent=1 // pred_check_branch
      %2992 = sbr.rel (0) target = $region53
    $region52: #{critic_forward.1} parent=1 // pred_region
      _
    $region53: #{critic_forward.1} parent=1 // pred_fallthru
      _
    // Predicated region
    $region54: #{critic_forward.1} parent=1 // pred_check
      _
    $region55: #{critic_forward.1} parent=1 // pred_check_branch
      %2994 = sbr.rel (0) target = $region57
    $region56: #{critic_forward.1} parent=1 // pred_region
      _
    $region57: #{critic_forward.1} parent=1 // pred_fallthru
      _
    %2995 = vsyncpa [#allocation3], 1
    %2996 = vsyncpa [#allocation5], 1

</llo_original>
